<compile_context>
chip_gen: v7x
topology: tpu7x:2x2x1
jax: 0.10.0
libtpu: 0.0.40
codegen_flags: <defaults>
</compile_context>

<pallas_src>
import functools

import jax
import jax.numpy as jnp
from jax import lax
from jax.experimental import pallas as pl
from jax.experimental.pallas import tpu as pltpu


def _round_up(x, m):
    return ((x + m - 1) // m) * m


# ----------------------- Pallas kernel -----------------------

def _spatial_gate_kernel(x_ref, w_ref, b_ref, o_ref,
                         max_acc, sum_acc, pad_max, pad_mean, *, k, C):
    """Fused SpatialGate.  grid = (N, C_tiles); axis 1 is the C reduction.

    x_ref    : (1, c_tile, H, W) VMEM block of the input.
    w_ref    : (2*k*k,) folded conv+BN weights in SMEM (chan 0 = max, 1 = mean).
    b_ref    : (1,) folded bias in SMEM.
    o_ref    : (1, H, Wp) lane-dense output block (cols >= W are junk, sliced
               off in the wrapper).
    max_acc, sum_acc   : (H, W) running channel max / sum accumulators.
    pad_max, pad_mean  : (H + 2p, Wp) zero-halo padded maps for the conv.
    """
    _, _, H, W = x_ref.shape
    _, _, Wp = o_ref.shape
    p = k // 2
    c_idx = pl.program_id(1)

    # ---- channel compression: running max / sum over C tiles (VPU) ----
    xv = x_ref[0]                               # (c_tile, H, W)
    tile_max = jnp.max(xv, axis=0)              # (H, W)
    tile_sum = jnp.sum(xv, axis=0)              # (H, W)

    @pl.when(c_idx == 0)
    def _init():
        max_acc[...] = jnp.full((H, W), -jnp.inf, dtype=jnp.float32)
        sum_acc[...] = jnp.zeros((H, W), dtype=jnp.float32)

    max_acc[...] = jnp.maximum(max_acc[...], tile_max)
    sum_acc[...] = sum_acc[...] + tile_sum

    # ---- last C step: 7x7 conv (BN folded) -> relu -> sigmoid ----
    @pl.when(c_idx == pl.num_programs(1) - 1)
    def _finalize():
        xmax = max_acc[...]
        xmean = sum_acc[...] * (1.0 / C)

        # Padded layout: map at rows [p, p+H), cols [0, W); everything else 0.
        # Only the halo is zeroed (once per image), the interior store is at
        # lane offset 0 (no lane-rotate), sublane offset p only.
        zero_rows = jnp.zeros((p, Wp), jnp.float32)
        zero_cols = jnp.zeros((H, Wp - W), jnp.float32)
        for pad, m in ((pad_max, xmax), (pad_mean, xmean)):
            pad[0:p, :] = zero_rows
            pad[p + H:p + H + p, :] = zero_rows
            pad[p:p + H, W:Wp] = zero_cols
            pad[p:p + H, 0:W] = m

        # out[i, j] = sum_{di,dj} w[di,dj] * pad[i+di, (j+dj-p) mod Wp]
        # Lane shifts via static pltpu.roll (XLU): because cols [W, Wp) are
        # zero and Wp >= W+p, any wrapped lane reads a zero -> exactly the
        # Conv2d zero padding.  Valid output columns are [0, W).
        acc = jnp.zeros((H, Wp), jnp.float32)
        for ci, pad in enumerate((pad_max, pad_mean)):
            base = ci * k * k
            for di in range(k):
                band = pad[di:di + H, :]                # (H, Wp) row band
                for dj in range(k):
                    shift = (p - dj) % Wp               # static, non-negative
                    shifted = band if shift == 0 else pltpu.roll(
                        band, shift=shift, axis=1)
                    acc = acc + w_ref[base + di * k + dj] * shifted

        acc = jnp.maximum(acc + b_ref[0], 0.0)          # act='relu'
        o_ref[0] = 1.0 / (1.0 + jnp.exp(-acc))          # sigmoid gate (exp on EUP)


def _pick_c_tile(C, H, W, budget_bytes=4 * 1024 * 1024):
    """Largest divisor of C whose (c_tile, H, W) f32 block fits the budget."""
    max_ct = max(1, budget_bytes // (H * W * 4))
    if C <= max_ct:
        return C
    for ct in range(min(C, max_ct), 0, -1):
        if C % ct == 0:
            return ct
    return C


def spatial_gate_forward(x_nchw, params, *, k=7):
    """x_nchw: (N, C, H, W) float32 -> scale (N, 1, H, W) float32."""
    w_flat, b = params
    N, C, H, W = x_nchw.shape
    p = k // 2
    Wp = _round_up(W + p, 128)          # lane-dense padded/output width

    c_tile = _pick_c_tile(C, H, W)
    n_c = C // c_tile

    kernel = functools.partial(_spatial_gate_kernel, k=k, C=C)
    out_padded = pl.pallas_call(
        kernel,
        out_shape=jax.ShapeDtypeStruct((N, H, Wp), jnp.float32),
        grid=(N, n_c),
        in_specs=[
            pl.BlockSpec((1, c_tile, H, W), lambda n, c: (n, c, 0, 0)),
            pl.BlockSpec(memory_space=pltpu.MemorySpace.SMEM),   # folded weights
            pl.BlockSpec(memory_space=pltpu.MemorySpace.SMEM),   # folded bias
        ],
        out_specs=pl.BlockSpec((1, H, Wp), lambda n, c: (n, 0, 0)),
        scratch_shapes=[
            pltpu.VMEM((H, W), jnp.float32),                 # running channel max
            pltpu.VMEM((H, W), jnp.float32),                 # running channel sum
            pltpu.VMEM((H + 2 * p, Wp), jnp.float32),        # padded max map
            pltpu.VMEM((H + 2 * p, Wp), jnp.float32),        # padded mean map
        ],
        compiler_params=pltpu.CompilerParams(
            dimension_semantics=("parallel", "arbitrary"),
            vmem_limit_bytes=32 * 1024 * 1024,
        ),
    )(x_nchw, w_flat, b)
    # Drop lane padding and restore the channel dim (tiny slice, free reshape).
    return out_padded[:, :, :W].reshape(N, 1, H, W)


# ----------------------- Parameter setup (BN eval-mode folded) -----------------------

def make_spatial_gate_params(key, *, k=7, eps=1e-5):
    """Conv2d(2,1,k) weight + BatchNorm2d(1) (eval mode) folded into (w, b)."""
    kw, kg, kb, km, kv = jax.random.split(key, 5)
    w = jax.random.normal(kw, (1, 2, k, k), jnp.float32) / jnp.sqrt(2.0 * k * k)
    gamma = jax.random.uniform(kg, (1,), jnp.float32, 0.5, 1.5)
    beta = jax.random.normal(kb, (1,), jnp.float32) * 0.1
    mean = jax.random.normal(km, (1,), jnp.float32) * 0.1
    var = jax.random.uniform(kv, (1,), jnp.float32, 0.5, 1.5)
    scale = gamma / jnp.sqrt(var + eps)
    w_folded = w * scale[:, None, None, None]   # (1, 2, k, k)
    b_folded = beta - mean * scale              # (1,)
    return w_folded.reshape(-1), b_folded       # (2*k*k,), (1,)


# ----------------------- Pure-JAX reference -----------------------

def spatial_gate_reference(x_nchw, params, *, k=7):
    w_flat, b = params
    p = k // 2
    w = w_flat.reshape(1, 2, k, k)
    xmax = jnp.max(x_nchw, axis=1, keepdims=True)
    xmean = jnp.mean(x_nchw, axis=1, keepdims=True)
    xc = jnp.concatenate([xmax, xmean], axis=1)           # (N, 2, H, W)
    y = lax.conv_general_dilated(
        xc, w, window_strides=(1, 1), padding=((p, p), (p, p)),
        dimension_numbers=("NCHW", "OIHW", "NCHW"))
    y = y + b[0]
    y = jnp.maximum(y, 0.0)
    return 1.0 / (1.0 + jnp.exp(-y))


# ----------------------- Main -----------------------

if __name__ == "__main__":
    key = jax.random.PRNGKey(0)
    k_x, k_p = jax.random.split(key)

    N, C, H, W = 2, 8, 16, 16
    x = jax.random.normal(k_x, (N, C, H, W), jnp.float32)
    params = make_spatial_gate_params(k_p, k=7)

    out = jax.block_until_ready(spatial_gate_forward(x, params, k=7))
    ref = jax.block_until_ready(spatial_gate_reference(x, params, k=7))

    assert out.shape == (N, 1, H, W), out.shape
    assert jnp.allclose(out, ref, atol=1e-5, rtol=1e-5), "mismatch vs reference"

    print("KERNEL_OK")
</pallas_src>

<mosaic_0001>
module attributes {stable_mosaic.version = 11 : i64} {
  func.func @_spatial_gate_kernel(%arg0: i32, %arg1: i32, %arg2: memref<1x8x16x16xf32, #tpu.memory_space<vmem>>, %arg3: memref<98xf32, #tpu.memory_space<smem>>, %arg4: memref<1xf32, #tpu.memory_space<smem>>, %arg5: memref<1x16x128xf32, #tpu.memory_space<vmem>>, %arg6: memref<16x16xf32, #tpu.memory_space<vmem>>, %arg7: memref<16x16xf32, #tpu.memory_space<vmem>>, %arg8: memref<22x128xf32, #tpu.memory_space<vmem>>, %arg9: memref<22x128xf32, #tpu.memory_space<vmem>>) attributes {dimension_semantics = [#tpu.dimension_semantics<parallel>, #tpu.dimension_semantics<arbitrary>], iteration_bounds = array<i64: 2, 1>, scalar_prefetch = 0 : i64, scratch_operands = 4 : i64, tpu.core_type = #tpu.core_type<tc>, window_params = [{transform_indices = @transform_0, window_bounds = array<i64: 1, 8, 16, 16>}, {transform_indices = @transform_1, window_bounds = array<i64: 98>}, {transform_indices = @transform_2, window_bounds = array<i64: 1>}, {transform_indices = @transform_3, window_bounds = array<i64: 1, 16, 128>}]} {
    %c0 = arith.constant 0 : index
    %c0_0 = arith.constant 0 : index
    %c0_1 = arith.constant 0 : index
    %c0_2 = arith.constant 0 : index
    %0 = vector.load %arg2[%c0, %c0_0, %c0_1, %c0_2] : memref<1x8x16x16xf32, #tpu.memory_space<vmem>>, vector<1x8x16x16xf32>
    %1 = vector.shape_cast %0 : vector<1x8x16x16xf32> to vector<8x16x16xf32>
    %cst = arith.constant dense<0xFF800000> : vector<16x16xf32>
    %2 = vector.multi_reduction <maximumf>, %1, %cst [0] : vector<8x16x16xf32> to vector<16x16xf32>
    %cst_3 = arith.constant dense<0.000000e+00> : vector<16x16xf32>
    %3 = vector.multi_reduction <add>, %1, %cst_3 [0] : vector<8x16x16xf32> to vector<16x16xf32>
    %c0_i32 = arith.constant 0 : i32
    %4 = arith.cmpi eq, %arg1, %c0_i32 : i32
    %5 = arith.extui %4 : i1 to i32
    %c0_i32_4 = arith.constant 0 : i32
    %6 = arith.cmpi ne, %5, %c0_i32_4 : i32
    scf.if %6 {
      %cst_15 = arith.constant 0xFF800000 : f32
      %16 = vector.broadcast %cst_15 : f32 to vector<16x16xf32>
      %c0_16 = arith.constant 0 : index
      %c0_17 = arith.constant 0 : index
      %17 = vector.load %arg6[%c0_16, %c0_17] : memref<16x16xf32, #tpu.memory_space<vmem>>, vector<16x16xf32>
      tpu.vector_store %arg6[%c0_16, %c0_17], %16 {strides = array<i32>} : memref<16x16xf32, #tpu.memory_space<vmem>>, vector<16x16xf32>,
      %cst_18 = arith.constant 0.000000e+00 : f32
      %18 = vector.broadcast %cst_18 : f32 to vector<16x16xf32>
      %c0_19 = arith.constant 0 : index
      %c0_20 = arith.constant 0 : index
      %19 = vector.load %arg7[%c0_19, %c0_20] : memref<16x16xf32, #tpu.memory_space<vmem>>, vector<16x16xf32>
      tpu.vector_store %arg7[%c0_19, %c0_20], %18 {strides = array<i32>} : memref<16x16xf32, #tpu.memory_space<vmem>>, vector<16x16xf32>,
    } else {
    }
    %c0_5 = arith.constant 0 : index
    %c0_6 = arith.constant 0 : index
    %7 = vector.load %arg6[%c0_5, %c0_6] : memref<16x16xf32, #tpu.memory_space<vmem>>, vector<16x16xf32>
    %8 = arith.maximumf %7, %2 : vector<16x16xf32>
    %c0_7 = arith.constant 0 : index
    %c0_8 = arith.constant 0 : index
    %9 = vector.load %arg6[%c0_7, %c0_8] : memref<16x16xf32, #tpu.memory_space<vmem>>, vector<16x16xf32>
    tpu.vector_store %arg6[%c0_7, %c0_8], %8 {strides = array<i32>} : memref<16x16xf32, #tpu.memory_space<vmem>>, vector<16x16xf32>,
    %c0_9 = arith.constant 0 : index
    %c0_10 = arith.constant 0 : index
    %10 = vector.load %arg7[%c0_9, %c0_10] : memref<16x16xf32, #tpu.memory_space<vmem>>, vector<16x16xf32>
    %11 = arith.addf %10, %3 : vector<16x16xf32>
    %c0_11 = arith.constant 0 : index
    %c0_12 = arith.constant 0 : index
    %12 = vector.load %arg7[%c0_11, %c0_12] : memref<16x16xf32, #tpu.memory_space<vmem>>, vector<16x16xf32>
    tpu.vector_store %arg7[%c0_11, %c0_12], %11 {strides = array<i32>} : memref<16x16xf32, #tpu.memory_space<vmem>>, vector<16x16xf32>,
    %c0_i32_13 = arith.constant 0 : i32
    %13 = arith.cmpi eq, %arg1, %c0_i32_13 : i32
    %14 = arith.extui %13 : i1 to i32
    %c0_i32_14 = arith.constant 0 : i32
    %15 = arith.cmpi ne, %14, %c0_i32_14 : i32
    scf.if %15 {
      %c0_15 = arith.constant 0 : index
      %c0_16 = arith.constant 0 : index
      %16 = vector.load %arg6[%c0_15, %c0_16] : memref<16x16xf32, #tpu.memory_space<vmem>>, vector<16x16xf32>
      %c0_17 = arith.constant 0 : index
      %c0_18 = arith.constant 0 : index
      %17 = vector.load %arg7[%c0_17, %c0_18] : memref<16x16xf32, #tpu.memory_space<vmem>>, vector<16x16xf32>
      %cst_19 = arith.constant 1.250000e-01 : f32
      %18 = vector.broadcast %cst_19 : f32 to vector<16x16xf32>
      %19 = arith.mulf %17, %18 : vector<16x16xf32>
      %cst_20 = arith.constant 0.000000e+00 : f32
      %20 = vector.broadcast %cst_20 : f32 to vector<3x128xf32>
      %cst_21 = arith.constant 0.000000e+00 : f32
      %21 = vector.broadcast %cst_21 : f32 to vector<16x112xf32>
      %c0_22 = arith.constant 0 : index
      %c0_23 = arith.constant 0 : index
      %22 = vector.load %arg8[%c0_22, %c0_23] : memref<22x128xf32, #tpu.memory_space<vmem>>, vector<3x128xf32>
      tpu.vector_store %arg8[%c0_22, %c0_23], %20 {strides = array<i32>} : memref<22x128xf32, #tpu.memory_space<vmem>>, vector<3x128xf32>,
      %c19 = arith.constant 19 : index
      %c0_24 = arith.constant 0 : index
      %23 = vector.load %arg8[%c19, %c0_24] : memref<22x128xf32, #tpu.memory_space<vmem>>, vector<3x128xf32>
      tpu.vector_store %arg8[%c19, %c0_24], %20 {strides = array<i32>} : memref<22x128xf32, #tpu.memory_space<vmem>>, vector<3x128xf32>,
      %c3 = arith.constant 3 : index
      %c16 = arith.constant 16 : index
      %24 = vector.load %arg8[%c3, %c16] : memref<22x128xf32, #tpu.memory_space<vmem>>, vector<16x112xf32>
      tpu.vector_store %arg8[%c3, %c16], %21 {strides = array<i32>} : memref<22x128xf32, #tpu.memory_space<vmem>>, vector<16x112xf32>,
      %c3_25 = arith.constant 3 : index
      %c0_26 = arith.constant 0 : index
      %25 = vector.load %arg8[%c3_25, %c0_26] : memref<22x128xf32, #tpu.memory_space<vmem>>, vector<16x16xf32>
      tpu.vector_store %arg8[%c3_25, %c0_26], %16 {strides = array<i32>} : memref<22x128xf32, #tpu.memory_space<vmem>>, vector<16x16xf32>,
      %c0_27 = arith.constant 0 : index
      %c0_28 = arith.constant 0 : index
      %26 = vector.load %arg9[%c0_27, %c0_28] : memref<22x128xf32, #tpu.memory_space<vmem>>, vector<3x128xf32>
      tpu.vector_store %arg9[%c0_27, %c0_28], %20 {strides = array<i32>} : memref<22x128xf32, #tpu.memory_space<vmem>>, vector<3x128xf32>,
      %c19_29 = arith.constant 19 : index
      %c0_30 = arith.constant 0 : index
      %27 = vector.load %arg9[%c19_29, %c0_30] : memref<22x128xf32, #tpu.memory_space<vmem>>, vector<3x128xf32>
      tpu.vector_store %arg9[%c19_29, %c0_30], %20 {strides = array<i32>} : memref<22x128xf32, #tpu.memory_space<vmem>>, vector<3x128xf32>,
      %c3_31 = arith.constant 3 : index
      %c16_32 = arith.constant 16 : index
      %28 = vector.load %arg9[%c3_31, %c16_32] : memref<22x128xf32, #tpu.memory_space<vmem>>, vector<16x112xf32>
      tpu.vector_store %arg9[%c3_31, %c16_32], %21 {strides = array<i32>} : memref<22x128xf32, #tpu.memory_space<vmem>>, vector<16x112xf32>,
      %c3_33 = arith.constant 3 : index
      %c0_34 = arith.constant 0 : index
      %29 = vector.load %arg9[%c3_33, %c0_34] : memref<22x128xf32, #tpu.memory_space<vmem>>, vector<16x16xf32>
      tpu.vector_store %arg9[%c3_33, %c0_34], %19 {strides = array<i32>} : memref<22x128xf32, #tpu.memory_space<vmem>>, vector<16x16xf32>,
      %cst_35 = arith.constant 0.000000e+00 : f32
      %30 = vector.broadcast %cst_35 : f32 to vector<16x128xf32>
      %c0_36 = arith.constant 0 : index
      %c0_37 = arith.constant 0 : index
      %31 = vector.load %arg8[%c0_36, %c0_37] : memref<22x128xf32, #tpu.memory_space<vmem>>, vector<16x128xf32>
      %c3_i32 = arith.constant 3 : i32
      %32 = tpu.dynamic_rotate %31 by %c3_i32 dim 1 : vector<16x128xf32>, i32 -> vector<16x128xf32>
      %c0_38 = arith.constant 0 : index
      %33 = memref.load %arg3[%c0_38] : memref<98xf32, #tpu.memory_space<smem>>
      %34 = vector.broadcast %33 : f32 to vector<16x128xf32>
      %35 = arith.mulf %34, %32 : vector<16x128xf32>
      %36 = arith.addf %30, %35 : vector<16x128xf32>
      %c2_i32 = arith.constant 2 : i32
      %37 = tpu.dynamic_rotate %31 by %c2_i32 dim 1 : vector<16x128xf32>, i32 -> vector<16x128xf32>
      %c1 = arith.constant 1 : index
      %38 = memref.load %arg3[%c1] : memref<98xf32, #tpu.memory_space<smem>>
      %39 = vector.broadcast %38 : f32 to vector<16x128xf32>
      %40 = arith.mulf %39, %37 : vector<16x128xf32>
      %41 = arith.addf %36, %40 : vector<16x128xf32>
      %c1_i32 = arith.constant 1 : i32
      %42 = tpu.dynamic_rotate %31 by %c1_i32 dim 1 : vector<16x128xf32>, i32 -> vector<16x128xf32>
      %c2 = arith.constant 2 : index
      %43 = memref.load %arg3[%c2] : memref<98xf32, #tpu.memory_space<smem>>
      %44 = vector.broadcast %43 : f32 to vector<16x128xf32>
      %45 = arith.mulf %44, %42 : vector<16x128xf32>
      %46 = arith.addf %41, %45 : vector<16x128xf32>
      %c3_39 = arith.constant 3 : index
      %47 = memref.load %arg3[%c3_39] : memref<98xf32, #tpu.memory_space<smem>>
      %48 = vector.broadcast %47 : f32 to vector<16x128xf32>
      %49 = arith.mulf %48, %31 : vector<16x128xf32>
      %50 = arith.addf %46, %49 : vector<16x128xf32>
      %c127_i32 = arith.constant 127 : i32
      %51 = tpu.dynamic_rotate %31 by %c127_i32 dim 1 : vector<16x128xf32>, i32 -> vector<16x128xf32>
      %c4 = arith.constant 4 : index
      %52 = memref.load %arg3[%c4] : memref<98xf32, #tpu.memory_space<smem>>
      %53 = vector.broadcast %52 : f32 to vector<16x128xf32>
      %54 = arith.mulf %53, %51 : vector<16x128xf32>
      %55 = arith.addf %50, %54 : vector<16x128xf32>
      %c126_i32 = arith.constant 126 : i32
      %56 = tpu.dynamic_rotate %31 by %c126_i32 dim 1 : vector<16x128xf32>, i32 -> vector<16x128xf32>
      %c5 = arith.constant 5 : index
      %57 = memref.load %arg3[%c5] : memref<98xf32, #tpu.memory_space<smem>>
      %58 = vector.broadcast %57 : f32 to vector<16x128xf32>
      %59 = arith.mulf %58, %56 : vector<16x128xf32>
      %60 = arith.addf %55, %59 : vector<16x128xf32>
      %c125_i32 = arith.constant 125 : i32
      %61 = tpu.dynamic_rotate %31 by %c125_i32 dim 1 : vector<16x128xf32>, i32 -> vector<16x128xf32>
      %c6 = arith.constant 6 : index
      %62 = memref.load %arg3[%c6] : memref<98xf32, #tpu.memory_space<smem>>
      %63 = vector.broadcast %62 : f32 to vector<16x128xf32>
      %64 = arith.mulf %63, %61 : vector<16x128xf32>
      %65 = arith.addf %60, %64 : vector<16x128xf32>
      %c1_40 = arith.constant 1 : index
      %c0_41 = arith.constant 0 : index
      %66 = vector.load %arg8[%c1_40, %c0_41] : memref<22x128xf32, #tpu.memory_space<vmem>>, vector<16x128xf32>
      %c3_i32_42 = arith.constant 3 : i32
      %67 = tpu.dynamic_rotate %66 by %c3_i32_42 dim 1 : vector<16x128xf32>, i32 -> vector<16x128xf32>
      %c7 = arith.constant 7 : index
      %68 = memref.load %arg3[%c7] : memref<98xf32, #tpu.memory_space<smem>>
      %69 = vector.broadcast %68 : f32 to vector<16x128xf32>
      %70 = arith.mulf %69, %67 : vector<16x128xf32>
      %71 = arith.addf %65, %70 : vector<16x128xf32>
      %c2_i32_43 = arith.constant 2 : i32
      %72 = tpu.dynamic_rotate %66 by %c2_i32_43 dim 1 : vector<16x128xf32>, i32 -> vector<16x128xf32>
      %c8 = arith.constant 8 : index
      %73 = memref.load %arg3[%c8] : memref<98xf32, #tpu.memory_space<smem>>
      %74 = vector.broadcast %73 : f32 to vector<16x128xf32>
      %75 = arith.mulf %74, %72 : vector<16x128xf32>
      %76 = arith.addf %71, %75 : vector<16x128xf32>
      %c1_i32_44 = arith.constant 1 : i32
      %77 = tpu.dynamic_rotate %66 by %c1_i32_44 dim 1 : vector<16x128xf32>, i32 -> vector<16x128xf32>
      %c9 = arith.constant 9 : index
      %78 = memref.load %arg3[%c9] : memref<98xf32, #tpu.memory_space<smem>>
      %79 = vector.broadcast %78 : f32 to vector<16x128xf32>
      %80 = arith.mulf %79, %77 : vector<16x128xf32>
      %81 = arith.addf %76, %80 : vector<16x128xf32>
      %c10 = arith.constant 10 : index
      %82 = memref.load %arg3[%c10] : memref<98xf32, #tpu.memory_space<smem>>
      %83 = vector.broadcast %82 : f32 to vector<16x128xf32>
      %84 = arith.mulf %83, %66 : vector<16x128xf32>
      %85 = arith.addf %81, %84 : vector<16x128xf32>
      %c127_i32_45 = arith.constant 127 : i32
      %86 = tpu.dynamic_rotate %66 by %c127_i32_45 dim 1 : vector<16x128xf32>, i32 -> vector<16x128xf32>
      %c11 = arith.constant 11 : index
      %87 = memref.load %arg3[%c11] : memref<98xf32, #tpu.memory_space<smem>>
      %88 = vector.broadcast %87 : f32 to vector<16x128xf32>
      %89 = arith.mulf %88, %86 : vector<16x128xf32>
      %90 = arith.addf %85, %89 : vector<16x128xf32>
      %c126_i32_46 = arith.constant 126 : i32
      %91 = tpu.dynamic_rotate %66 by %c126_i32_46 dim 1 : vector<16x128xf32>, i32 -> vector<16x128xf32>
      %c12 = arith.constant 12 : index
      %92 = memref.load %arg3[%c12] : memref<98xf32, #tpu.memory_space<smem>>
      %93 = vector.broadcast %92 : f32 to vector<16x128xf32>
      %94 = arith.mulf %93, %91 : vector<16x128xf32>
      %95 = arith.addf %90, %94 : vector<16x128xf32>
      %c125_i32_47 = arith.constant 125 : i32
      %96 = tpu.dynamic_rotate %66 by %c125_i32_47 dim 1 : vector<16x128xf32>, i32 -> vector<16x128xf32>
      %c13 = arith.constant 13 : index
      %97 = memref.load %arg3[%c13] : memref<98xf32, #tpu.memory_space<smem>>
      %98 = vector.broadcast %97 : f32 to vector<16x128xf32>
      %99 = arith.mulf %98, %96 : vector<16x128xf32>
      %100 = arith.addf %95, %99 : vector<16x128xf32>
      %c2_48 = arith.constant 2 : index
      %c0_49 = arith.constant 0 : index
      %101 = vector.load %arg8[%c2_48, %c0_49] : memref<22x128xf32, #tpu.memory_space<vmem>>, vector<16x128xf32>
      %c3_i32_50 = arith.constant 3 : i32
      %102 = tpu.dynamic_rotate %101 by %c3_i32_50 dim 1 : vector<16x128xf32>, i32 -> vector<16x128xf32>
      %c14 = arith.constant 14 : index
      %103 = memref.load %arg3[%c14] : memref<98xf32, #tpu.memory_space<smem>>
      %104 = vector.broadcast %103 : f32 to vector<16x128xf32>
      %105 = arith.mulf %104, %102 : vector<16x128xf32>
      %106 = arith.addf %100, %105 : vector<16x128xf32>
      %c2_i32_51 = arith.constant 2 : i32
      %107 = tpu.dynamic_rotate %101 by %c2_i32_51 dim 1 : vector<16x128xf32>, i32 -> vector<16x128xf32>
      %c15 = arith.constant 15 : index
      %108 = memref.load %arg3[%c15] : memref<98xf32, #tpu.memory_space<smem>>
      %109 = vector.broadcast %108 : f32 to vector<16x128xf32>
      %110 = arith.mulf %109, %107 : vector<16x128xf32>
      %111 = arith.addf %106, %110 : vector<16x128xf32>
      %c1_i32_52 = arith.constant 1 : i32
      %112 = tpu.dynamic_rotate %101 by %c1_i32_52 dim 1 : vector<16x128xf32>, i32 -> vector<16x128xf32>
      %c16_53 = arith.constant 16 : index
      %113 = memref.load %arg3[%c16_53] : memref<98xf32, #tpu.memory_space<smem>>
      %114 = vector.broadcast %113 : f32 to vector<16x128xf32>
      %115 = arith.mulf %114, %112 : vector<16x128xf32>
      %116 = arith.addf %111, %115 : vector<16x128xf32>
      %c17 = arith.constant 17 : index
      %117 = memref.load %arg3[%c17] : memref<98xf32, #tpu.memory_space<smem>>
      %118 = vector.broadcast %117 : f32 to vector<16x128xf32>
      %119 = arith.mulf %118, %101 : vector<16x128xf32>
      %120 = arith.addf %116, %119 : vector<16x128xf32>
      %c127_i32_54 = arith.constant 127 : i32
      %121 = tpu.dynamic_rotate %101 by %c127_i32_54 dim 1 : vector<16x128xf32>, i32 -> vector<16x128xf32>
      %c18 = arith.constant 18 : index
      %122 = memref.load %arg3[%c18] : memref<98xf32, #tpu.memory_space<smem>>
      %123 = vector.broadcast %122 : f32 to vector<16x128xf32>
      %124 = arith.mulf %123, %121 : vector<16x128xf32>
      %125 = arith.addf %120, %124 : vector<16x128xf32>
      %c126_i32_55 = arith.constant 126 : i32
      %126 = tpu.dynamic_rotate %101 by %c126_i32_55 dim 1 : vector<16x128xf32>, i32 -> vector<16x128xf32>
      %c19_56 = arith.constant 19 : index
      %127 = memref.load %arg3[%c19_56] : memref<98xf32, #tpu.memory_space<smem>>
      %128 = vector.broadcast %127 : f32 to vector<16x128xf32>
      %129 = arith.mulf %128, %126 : vector<16x128xf32>
      %130 = arith.addf %125, %129 : vector<16x128xf32>
      %c125_i32_57 = arith.constant 125 : i32
      %131 = tpu.dynamic_rotate %101 by %c125_i32_57 dim 1 : vector<16x128xf32>, i32 -> vector<16x128xf32>
      %c20 = arith.constant 20 : index
      %132 = memref.load %arg3[%c20] : memref<98xf32, #tpu.memory_space<smem>>
      %133 = vector.broadcast %132 : f32 to vector<16x128xf32>
      %134 = arith.mulf %133, %131 : vector<16x128xf32>
      %135 = arith.addf %130, %134 : vector<16x128xf32>
      %c3_58 = arith.constant 3 : index
      %c0_59 = arith.constant 0 : index
      %136 = vector.load %arg8[%c3_58, %c0_59] : memref<22x128xf32, #tpu.memory_space<vmem>>, vector<16x128xf32>
      %c3_i32_60 = arith.constant 3 : i32
      %137 = tpu.dynamic_rotate %136 by %c3_i32_60 dim 1 : vector<16x128xf32>, i32 -> vector<16x128xf32>
      %c21 = arith.constant 21 : index
      %138 = memref.load %arg3[%c21] : memref<98xf32, #tpu.memory_space<smem>>
      %139 = vector.broadcast %138 : f32 to vector<16x128xf32>
      %140 = arith.mulf %139, %137 : vector<16x128xf32>
      %141 = arith.addf %135, %140 : vector<16x128xf32>
      %c2_i32_61 = arith.constant 2 : i32
      %142 = tpu.dynamic_rotate %136 by %c2_i32_61 dim 1 : vector<16x128xf32>, i32 -> vector<16x128xf32>
      %c22 = arith.constant 22 : index
      %143 = memref.load %arg3[%c22] : memref<98xf32, #tpu.memory_space<smem>>
      %144 = vector.broadcast %143 : f32 to vector<16x128xf32>
      %145 = arith.mulf %144, %142 : vector<16x128xf32>
      %146 = arith.addf %141, %145 : vector<16x128xf32>
      %c1_i32_62 = arith.constant 1 : i32
      %147 = tpu.dynamic_rotate %136 by %c1_i32_62 dim 1 : vector<16x128xf32>, i32 -> vector<16x128xf32>
      %c23 = arith.constant 23 : index
      %148 = memref.load %arg3[%c23] : memref<98xf32, #tpu.memory_space<smem>>
      %149 = vector.broadcast %148 : f32 to vector<16x128xf32>
      %150 = arith.mulf %149, %147 : vector<16x128xf32>
      %151 = arith.addf %146, %150 : vector<16x128xf32>
      %c24 = arith.constant 24 : index
      %152 = memref.load %arg3[%c24] : memref<98xf32, #tpu.memory_space<smem>>
      %153 = vector.broadcast %152 : f32 to vector<16x128xf32>
      %154 = arith.mulf %153, %136 : vector<16x128xf32>
      %155 = arith.addf %151, %154 : vector<16x128xf32>
      %c127_i32_63 = arith.constant 127 : i32
      %156 = tpu.dynamic_rotate %136 by %c127_i32_63 dim 1 : vector<16x128xf32>, i32 -> vector<16x128xf32>
      %c25 = arith.constant 25 : index
      %157 = memref.load %arg3[%c25] : memref<98xf32, #tpu.memory_space<smem>>
      %158 = vector.broadcast %157 : f32 to vector<16x128xf32>
      %159 = arith.mulf %158, %156 : vector<16x128xf32>
      %160 = arith.addf %155, %159 : vector<16x128xf32>
      %c126_i32_64 = arith.constant 126 : i32
      %161 = tpu.dynamic_rotate %136 by %c126_i32_64 dim 1 : vector<16x128xf32>, i32 -> vector<16x128xf32>
      %c26 = arith.constant 26 : index
      %162 = memref.load %arg3[%c26] : memref<98xf32, #tpu.memory_space<smem>>
      %163 = vector.broadcast %162 : f32 to vector<16x128xf32>
      %164 = arith.mulf %163, %161 : vector<16x128xf32>
      %165 = arith.addf %160, %164 : vector<16x128xf32>
      %c125_i32_65 = arith.constant 125 : i32
      %166 = tpu.dynamic_rotate %136 by %c125_i32_65 dim 1 : vector<16x128xf32>, i32 -> vector<16x128xf32>
      %c27 = arith.constant 27 : index
      %167 = memref.load %arg3[%c27] : memref<98xf32, #tpu.memory_space<smem>>
      %168 = vector.broadcast %167 : f32 to vector<16x128xf32>
      %169 = arith.mulf %168, %166 : vector<16x128xf32>
      %170 = arith.addf %165, %169 : vector<16x128xf32>
      %c4_66 = arith.constant 4 : index
      %c0_67 = arith.constant 0 : index
      %171 = vector.load %arg8[%c4_66, %c0_67] : memref<22x128xf32, #tpu.memory_space<vmem>>, vector<16x128xf32>
      %c3_i32_68 = arith.constant 3 : i32
      %172 = tpu.dynamic_rotate %171 by %c3_i32_68 dim 1 : vector<16x128xf32>, i32 -> vector<16x128xf32>
      %c28 = arith.constant 28 : index
      %173 = memref.load %arg3[%c28] : memref<98xf32, #tpu.memory_space<smem>>
      %174 = vector.broadcast %173 : f32 to vector<16x128xf32>
      %175 = arith.mulf %174, %172 : vector<16x128xf32>
      %176 = arith.addf %170, %175 : vector<16x128xf32>
      %c2_i32_69 = arith.constant 2 : i32
      %177 = tpu.dynamic_rotate %171 by %c2_i32_69 dim 1 : vector<16x128xf32>, i32 -> vector<16x128xf32>
      %c29 = arith.constant 29 : index
      %178 = memref.load %arg3[%c29] : memref<98xf32, #tpu.memory_space<smem>>
      %179 = vector.broadcast %178 : f32 to vector<16x128xf32>
      %180 = arith.mulf %179, %177 : vector<16x128xf32>
      %181 = arith.addf %176, %180 : vector<16x128xf32>
      %c1_i32_70 = arith.constant 1 : i32
      %182 = tpu.dynamic_rotate %171 by %c1_i32_70 dim 1 : vector<16x128xf32>, i32 -> vector<16x128xf32>
      %c30 = arith.constant 30 : index
      %183 = memref.load %arg3[%c30] : memref<98xf32, #tpu.memory_space<smem>>
      %184 = vector.broadcast %183 : f32 to vector<16x128xf32>
      %185 = arith.mulf %184, %182 : vector<16x128xf32>
      %186 = arith.addf %181, %185 : vector<16x128xf32>
      %c31 = arith.constant 31 : index
      %187 = memref.load %arg3[%c31] : memref<98xf32, #tpu.memory_space<smem>>
      %188 = vector.broadcast %187 : f32 to vector<16x128xf32>
      %189 = arith.mulf %188, %171 : vector<16x128xf32>
      %190 = arith.addf %186, %189 : vector<16x128xf32>
      %c127_i32_71 = arith.constant 127 : i32
      %191 = tpu.dynamic_rotate %171 by %c127_i32_71 dim 1 : vector<16x128xf32>, i32 -> vector<16x128xf32>
      %c32 = arith.constant 32 : index
      %192 = memref.load %arg3[%c32] : memref<98xf32, #tpu.memory_space<smem>>
      %193 = vector.broadcast %192 : f32 to vector<16x128xf32>
      %194 = arith.mulf %193, %191 : vector<16x128xf32>
      %195 = arith.addf %190, %194 : vector<16x128xf32>
      %c126_i32_72 = arith.constant 126 : i32
      %196 = tpu.dynamic_rotate %171 by %c126_i32_72 dim 1 : vector<16x128xf32>, i32 -> vector<16x128xf32>
      %c33 = arith.constant 33 : index
      %197 = memref.load %arg3[%c33] : memref<98xf32, #tpu.memory_space<smem>>
      %198 = vector.broadcast %197 : f32 to vector<16x128xf32>
      %199 = arith.mulf %198, %196 : vector<16x128xf32>
      %200 = arith.addf %195, %199 : vector<16x128xf32>
      %c125_i32_73 = arith.constant 125 : i32
      %201 = tpu.dynamic_rotate %171 by %c125_i32_73 dim 1 : vector<16x128xf32>, i32 -> vector<16x128xf32>
      %c34 = arith.constant 34 : index
      %202 = memref.load %arg3[%c34] : memref<98xf32, #tpu.memory_space<smem>>
      %203 = vector.broadcast %202 : f32 to vector<16x128xf32>
      %204 = arith.mulf %203, %201 : vector<16x128xf32>
      %205 = arith.addf %200, %204 : vector<16x128xf32>
      %c5_74 = arith.constant 5 : index
      %c0_75 = arith.constant 0 : index
      %206 = vector.load %arg8[%c5_74, %c0_75] : memref<22x128xf32, #tpu.memory_space<vmem>>, vector<16x128xf32>
      %c3_i32_76 = arith.constant 3 : i32
      %207 = tpu.dynamic_rotate %206 by %c3_i32_76 dim 1 : vector<16x128xf32>, i32 -> vector<16x128xf32>
      %c35 = arith.constant 35 : index
      %208 = memref.load %arg3[%c35] : memref<98xf32, #tpu.memory_space<smem>>
      %209 = vector.broadcast %208 : f32 to vector<16x128xf32>
      %210 = arith.mulf %209, %207 : vector<16x128xf32>
      %211 = arith.addf %205, %210 : vector<16x128xf32>
      %c2_i32_77 = arith.constant 2 : i32
      %212 = tpu.dynamic_rotate %206 by %c2_i32_77 dim 1 : vector<16x128xf32>, i32 -> vector<16x128xf32>
      %c36 = arith.constant 36 : index
      %213 = memref.load %arg3[%c36] : memref<98xf32, #tpu.memory_space<smem>>
      %214 = vector.broadcast %213 : f32 to vector<16x128xf32>
      %215 = arith.mulf %214, %212 : vector<16x128xf32>
      %216 = arith.addf %211, %215 : vector<16x128xf32>
      %c1_i32_78 = arith.constant 1 : i32
      %217 = tpu.dynamic_rotate %206 by %c1_i32_78 dim 1 : vector<16x128xf32>, i32 -> vector<16x128xf32>
      %c37 = arith.constant 37 : index
      %218 = memref.load %arg3[%c37] : memref<98xf32, #tpu.memory_space<smem>>
      %219 = vector.broadcast %218 : f32 to vector<16x128xf32>
      %220 = arith.mulf %219, %217 : vector<16x128xf32>
      %221 = arith.addf %216, %220 : vector<16x128xf32>
      %c38 = arith.constant 38 : index
      %222 = memref.load %arg3[%c38] : memref<98xf32, #tpu.memory_space<smem>>
      %223 = vector.broadcast %222 : f32 to vector<16x128xf32>
      %224 = arith.mulf %223, %206 : vector<16x128xf32>
      %225 = arith.addf %221, %224 : vector<16x128xf32>
      %c127_i32_79 = arith.constant 127 : i32
      %226 = tpu.dynamic_rotate %206 by %c127_i32_79 dim 1 : vector<16x128xf32>, i32 -> vector<16x128xf32>
      %c39 = arith.constant 39 : index
      %227 = memref.load %arg3[%c39] : memref<98xf32, #tpu.memory_space<smem>>
      %228 = vector.broadcast %227 : f32 to vector<16x128xf32>
      %229 = arith.mulf %228, %226 : vector<16x128xf32>
      %230 = arith.addf %225, %229 : vector<16x128xf32>
      %c126_i32_80 = arith.constant 126 : i32
      %231 = tpu.dynamic_rotate %206 by %c126_i32_80 dim 1 : vector<16x128xf32>, i32 -> vector<16x128xf32>
      %c40 = arith.constant 40 : index
      %232 = memref.load %arg3[%c40] : memref<98xf32, #tpu.memory_space<smem>>
      %233 = vector.broadcast %232 : f32 to vector<16x128xf32>
      %234 = arith.mulf %233, %231 : vector<16x128xf32>
      %235 = arith.addf %230, %234 : vector<16x128xf32>
      %c125_i32_81 = arith.constant 125 : i32
      %236 = tpu.dynamic_rotate %206 by %c125_i32_81 dim 1 : vector<16x128xf32>, i32 -> vector<16x128xf32>
      %c41 = arith.constant 41 : index
      %237 = memref.load %arg3[%c41] : memref<98xf32, #tpu.memory_space<smem>>
      %238 = vector.broadcast %237 : f32 to vector<16x128xf32>
      %239 = arith.mulf %238, %236 : vector<16x128xf32>
      %240 = arith.addf %235, %239 : vector<16x128xf32>
      %c6_82 = arith.constant 6 : index
      %c0_83 = arith.constant 0 : index
      %241 = vector.load %arg8[%c6_82, %c0_83] : memref<22x128xf32, #tpu.memory_space<vmem>>, vector<16x128xf32>
      %c3_i32_84 = arith.constant 3 : i32
      %242 = tpu.dynamic_rotate %241 by %c3_i32_84 dim 1 : vector<16x128xf32>, i32 -> vector<16x128xf32>
      %c42 = arith.constant 42 : index
      %243 = memref.load %arg3[%c42] : memref<98xf32, #tpu.memory_space<smem>>
      %244 = vector.broadcast %243 : f32 to vector<16x128xf32>
      %245 = arith.mulf %244, %242 : vector<16x128xf32>
      %246 = arith.addf %240, %245 : vector<16x128xf32>
      %c2_i32_85 = arith.constant 2 : i32
      %247 = tpu.dynamic_rotate %241 by %c2_i32_85 dim 1 : vector<16x128xf32>, i32 -> vector<16x128xf32>
      %c43 = arith.constant 43 : index
      %248 = memref.load %arg3[%c43] : memref<98xf32, #tpu.memory_space<smem>>
      %249 = vector.broadcast %248 : f32 to vector<16x128xf32>
      %250 = arith.mulf %249, %247 : vector<16x128xf32>
      %251 = arith.addf %246, %250 : vector<16x128xf32>
      %c1_i32_86 = arith.constant 1 : i32
      %252 = tpu.dynamic_rotate %241 by %c1_i32_86 dim 1 : vector<16x128xf32>, i32 -> vector<16x128xf32>
      %c44 = arith.constant 44 : index
      %253 = memref.load %arg3[%c44] : memref<98xf32, #tpu.memory_space<smem>>
      %254 = vector.broadcast %253 : f32 to vector<16x128xf32>
      %255 = arith.mulf %254, %252 : vector<16x128xf32>
      %256 = arith.addf %251, %255 : vector<16x128xf32>
      %c45 = arith.constant 45 : index
      %257 = memref.load %arg3[%c45] : memref<98xf32, #tpu.memory_space<smem>>
      %258 = vector.broadcast %257 : f32 to vector<16x128xf32>
      %259 = arith.mulf %258, %241 : vector<16x128xf32>
      %260 = arith.addf %256, %259 : vector<16x128xf32>
      %c127_i32_87 = arith.constant 127 : i32
      %261 = tpu.dynamic_rotate %241 by %c127_i32_87 dim 1 : vector<16x128xf32>, i32 -> vector<16x128xf32>
      %c46 = arith.constant 46 : index
      %262 = memref.load %arg3[%c46] : memref<98xf32, #tpu.memory_space<smem>>
      %263 = vector.broadcast %262 : f32 to vector<16x128xf32>
      %264 = arith.mulf %263, %261 : vector<16x128xf32>
      %265 = arith.addf %260, %264 : vector<16x128xf32>
      %c126_i32_88 = arith.constant 126 : i32
      %266 = tpu.dynamic_rotate %241 by %c126_i32_88 dim 1 : vector<16x128xf32>, i32 -> vector<16x128xf32>
      %c47 = arith.constant 47 : index
      %267 = memref.load %arg3[%c47] : memref<98xf32, #tpu.memory_space<smem>>
      %268 = vector.broadcast %267 : f32 to vector<16x128xf32>
      %269 = arith.mulf %268, %266 : vector<16x128xf32>
      %270 = arith.addf %265, %269 : vector<16x128xf32>
      %c125_i32_89 = arith.constant 125 : i32
      %271 = tpu.dynamic_rotate %241 by %c125_i32_89 dim 1 : vector<16x128xf32>, i32 -> vector<16x128xf32>
      %c48 = arith.constant 48 : index
      %272 = memref.load %arg3[%c48] : memref<98xf32, #tpu.memory_space<smem>>
      %273 = vector.broadcast %272 : f32 to vector<16x128xf32>
      %274 = arith.mulf %273, %271 : vector<16x128xf32>
      %275 = arith.addf %270, %274 : vector<16x128xf32>
      %c0_90 = arith.constant 0 : index
      %c0_91 = arith.constant 0 : index
      %276 = vector.load %arg9[%c0_90, %c0_91] : memref<22x128xf32, #tpu.memory_space<vmem>>, vector<16x128xf32>
      %c3_i32_92 = arith.constant 3 : i32
      %277 = tpu.dynamic_rotate %276 by %c3_i32_92 dim 1 : vector<16x128xf32>, i32 -> vector<16x128xf32>
      %c49 = arith.constant 49 : index
      %278 = memref.load %arg3[%c49] : memref<98xf32, #tpu.memory_space<smem>>
      %279 = vector.broadcast %278 : f32 to vector<16x128xf32>
      %280 = arith.mulf %279, %277 : vector<16x128xf32>
      %281 = arith.addf %275, %280 : vector<16x128xf32>
      %c2_i32_93 = arith.constant 2 : i32
      %282 = tpu.dynamic_rotate %276 by %c2_i32_93 dim 1 : vector<16x128xf32>, i32 -> vector<16x128xf32>
      %c50 = arith.constant 50 : index
      %283 = memref.load %arg3[%c50] : memref<98xf32, #tpu.memory_space<smem>>
      %284 = vector.broadcast %283 : f32 to vector<16x128xf32>
      %285 = arith.mulf %284, %282 : vector<16x128xf32>
      %286 = arith.addf %281, %285 : vector<16x128xf32>
      %c1_i32_94 = arith.constant 1 : i32
      %287 = tpu.dynamic_rotate %276 by %c1_i32_94 dim 1 : vector<16x128xf32>, i32 -> vector<16x128xf32>
      %c51 = arith.constant 51 : index
      %288 = memref.load %arg3[%c51] : memref<98xf32, #tpu.memory_space<smem>>
      %289 = vector.broadcast %288 : f32 to vector<16x128xf32>
      %290 = arith.mulf %289, %287 : vector<16x128xf32>
      %291 = arith.addf %286, %290 : vector<16x128xf32>
      %c52 = arith.constant 52 : index
      %292 = memref.load %arg3[%c52] : memref<98xf32, #tpu.memory_space<smem>>
      %293 = vector.broadcast %292 : f32 to vector<16x128xf32>
      %294 = arith.mulf %293, %276 : vector<16x128xf32>
      %295 = arith.addf %291, %294 : vector<16x128xf32>
      %c127_i32_95 = arith.constant 127 : i32
      %296 = tpu.dynamic_rotate %276 by %c127_i32_95 dim 1 : vector<16x128xf32>, i32 -> vector<16x128xf32>
      %c53 = arith.constant 53 : index
      %297 = memref.load %arg3[%c53] : memref<98xf32, #tpu.memory_space<smem>>
      %298 = vector.broadcast %297 : f32 to vector<16x128xf32>
      %299 = arith.mulf %298, %296 : vector<16x128xf32>
      %300 = arith.addf %295, %299 : vector<16x128xf32>
      %c126_i32_96 = arith.constant 126 : i32
      %301 = tpu.dynamic_rotate %276 by %c126_i32_96 dim 1 : vector<16x128xf32>, i32 -> vector<16x128xf32>
      %c54 = arith.constant 54 : index
      %302 = memref.load %arg3[%c54] : memref<98xf32, #tpu.memory_space<smem>>
      %303 = vector.broadcast %302 : f32 to vector<16x128xf32>
      %304 = arith.mulf %303, %301 : vector<16x128xf32>
      %305 = arith.addf %300, %304 : vector<16x128xf32>
      %c125_i32_97 = arith.constant 125 : i32
      %306 = tpu.dynamic_rotate %276 by %c125_i32_97 dim 1 : vector<16x128xf32>, i32 -> vector<16x128xf32>
      %c55 = arith.constant 55 : index
      %307 = memref.load %arg3[%c55] : memref<98xf32, #tpu.memory_space<smem>>
      %308 = vector.broadcast %307 : f32 to vector<16x128xf32>
      %309 = arith.mulf %308, %306 : vector<16x128xf32>
      %310 = arith.addf %305, %309 : vector<16x128xf32>
      %c1_98 = arith.constant 1 : index
      %c0_99 = arith.constant 0 : index
      %311 = vector.load %arg9[%c1_98, %c0_99] : memref<22x128xf32, #tpu.memory_space<vmem>>, vector<16x128xf32>
      %c3_i32_100 = arith.constant 3 : i32
      %312 = tpu.dynamic_rotate %311 by %c3_i32_100 dim 1 : vector<16x128xf32>, i32 -> vector<16x128xf32>
      %c56 = arith.constant 56 : index
      %313 = memref.load %arg3[%c56] : memref<98xf32, #tpu.memory_space<smem>>
      %314 = vector.broadcast %313 : f32 to vector<16x128xf32>
      %315 = arith.mulf %314, %312 : vector<16x128xf32>
      %316 = arith.addf %310, %315 : vector<16x128xf32>
      %c2_i32_101 = arith.constant 2 : i32
      %317 = tpu.dynamic_rotate %311 by %c2_i32_101 dim 1 : vector<16x128xf32>, i32 -> vector<16x128xf32>
      %c57 = arith.constant 57 : index
      %318 = memref.load %arg3[%c57] : memref<98xf32, #tpu.memory_space<smem>>
      %319 = vector.broadcast %318 : f32 to vector<16x128xf32>
      %320 = arith.mulf %319, %317 : vector<16x128xf32>
      %321 = arith.addf %316, %320 : vector<16x128xf32>
      %c1_i32_102 = arith.constant 1 : i32
      %322 = tpu.dynamic_rotate %311 by %c1_i32_102 dim 1 : vector<16x128xf32>, i32 -> vector<16x128xf32>
      %c58 = arith.constant 58 : index
      %323 = memref.load %arg3[%c58] : memref<98xf32, #tpu.memory_space<smem>>
      %324 = vector.broadcast %323 : f32 to vector<16x128xf32>
      %325 = arith.mulf %324, %322 : vector<16x128xf32>
      %326 = arith.addf %321, %325 : vector<16x128xf32>
      %c59 = arith.constant 59 : index
      %327 = memref.load %arg3[%c59] : memref<98xf32, #tpu.memory_space<smem>>
      %328 = vector.broadcast %327 : f32 to vector<16x128xf32>
      %329 = arith.mulf %328, %311 : vector<16x128xf32>
      %330 = arith.addf %326, %329 : vector<16x128xf32>
      %c127_i32_103 = arith.constant 127 : i32
      %331 = tpu.dynamic_rotate %311 by %c127_i32_103 dim 1 : vector<16x128xf32>, i32 -> vector<16x128xf32>
      %c60 = arith.constant 60 : index
      %332 = memref.load %arg3[%c60] : memref<98xf32, #tpu.memory_space<smem>>
      %333 = vector.broadcast %332 : f32 to vector<16x128xf32>
      %334 = arith.mulf %333, %331 : vector<16x128xf32>
      %335 = arith.addf %330, %334 : vector<16x128xf32>
      %c126_i32_104 = arith.constant 126 : i32
      %336 = tpu.dynamic_rotate %311 by %c126_i32_104 dim 1 : vector<16x128xf32>, i32 -> vector<16x128xf32>
      %c61 = arith.constant 61 : index
      %337 = memref.load %arg3[%c61] : memref<98xf32, #tpu.memory_space<smem>>
      %338 = vector.broadcast %337 : f32 to vector<16x128xf32>
      %339 = arith.mulf %338, %336 : vector<16x128xf32>
      %340 = arith.addf %335, %339 : vector<16x128xf32>
      %c125_i32_105 = arith.constant 125 : i32
      %341 = tpu.dynamic_rotate %311 by %c125_i32_105 dim 1 : vector<16x128xf32>, i32 -> vector<16x128xf32>
      %c62 = arith.constant 62 : index
      %342 = memref.load %arg3[%c62] : memref<98xf32, #tpu.memory_space<smem>>
      %343 = vector.broadcast %342 : f32 to vector<16x128xf32>
      %344 = arith.mulf %343, %341 : vector<16x128xf32>
      %345 = arith.addf %340, %344 : vector<16x128xf32>
      %c2_106 = arith.constant 2 : index
      %c0_107 = arith.constant 0 : index
      %346 = vector.load %arg9[%c2_106, %c0_107] : memref<22x128xf32, #tpu.memory_space<vmem>>, vector<16x128xf32>
      %c3_i32_108 = arith.constant 3 : i32
      %347 = tpu.dynamic_rotate %346 by %c3_i32_108 dim 1 : vector<16x128xf32>, i32 -> vector<16x128xf32>
      %c63 = arith.constant 63 : index
      %348 = memref.load %arg3[%c63] : memref<98xf32, #tpu.memory_space<smem>>
      %349 = vector.broadcast %348 : f32 to vector<16x128xf32>
      %350 = arith.mulf %349, %347 : vector<16x128xf32>
      %351 = arith.addf %345, %350 : vector<16x128xf32>
      %c2_i32_109 = arith.constant 2 : i32
      %352 = tpu.dynamic_rotate %346 by %c2_i32_109 dim 1 : vector<16x128xf32>, i32 -> vector<16x128xf32>
      %c64 = arith.constant 64 : index
      %353 = memref.load %arg3[%c64] : memref<98xf32, #tpu.memory_space<smem>>
      %354 = vector.broadcast %353 : f32 to vector<16x128xf32>
      %355 = arith.mulf %354, %352 : vector<16x128xf32>
      %356 = arith.addf %351, %355 : vector<16x128xf32>
      %c1_i32_110 = arith.constant 1 : i32
      %357 = tpu.dynamic_rotate %346 by %c1_i32_110 dim 1 : vector<16x128xf32>, i32 -> vector<16x128xf32>
      %c65 = arith.constant 65 : index
      %358 = memref.load %arg3[%c65] : memref<98xf32, #tpu.memory_space<smem>>
      %359 = vector.broadcast %358 : f32 to vector<16x128xf32>
      %360 = arith.mulf %359, %357 : vector<16x128xf32>
      %361 = arith.addf %356, %360 : vector<16x128xf32>
      %c66 = arith.constant 66 : index
      %362 = memref.load %arg3[%c66] : memref<98xf32, #tpu.memory_space<smem>>
      %363 = vector.broadcast %362 : f32 to vector<16x128xf32>
      %364 = arith.mulf %363, %346 : vector<16x128xf32>
      %365 = arith.addf %361, %364 : vector<16x128xf32>
      %c127_i32_111 = arith.constant 127 : i32
      %366 = tpu.dynamic_rotate %346 by %c127_i32_111 dim 1 : vector<16x128xf32>, i32 -> vector<16x128xf32>
      %c67 = arith.constant 67 : index
      %367 = memref.load %arg3[%c67] : memref<98xf32, #tpu.memory_space<smem>>
      %368 = vector.broadcast %367 : f32 to vector<16x128xf32>
      %369 = arith.mulf %368, %366 : vector<16x128xf32>
      %370 = arith.addf %365, %369 : vector<16x128xf32>
      %c126_i32_112 = arith.constant 126 : i32
      %371 = tpu.dynamic_rotate %346 by %c126_i32_112 dim 1 : vector<16x128xf32>, i32 -> vector<16x128xf32>
      %c68 = arith.constant 68 : index
      %372 = memref.load %arg3[%c68] : memref<98xf32, #tpu.memory_space<smem>>
      %373 = vector.broadcast %372 : f32 to vector<16x128xf32>
      %374 = arith.mulf %373, %371 : vector<16x128xf32>
      %375 = arith.addf %370, %374 : vector<16x128xf32>
      %c125_i32_113 = arith.constant 125 : i32
      %376 = tpu.dynamic_rotate %346 by %c125_i32_113 dim 1 : vector<16x128xf32>, i32 -> vector<16x128xf32>
      %c69 = arith.constant 69 : index
      %377 = memref.load %arg3[%c69] : memref<98xf32, #tpu.memory_space<smem>>
      %378 = vector.broadcast %377 : f32 to vector<16x128xf32>
      %379 = arith.mulf %378, %376 : vector<16x128xf32>
      %380 = arith.addf %375, %379 : vector<16x128xf32>
      %c3_114 = arith.constant 3 : index
      %c0_115 = arith.constant 0 : index
      %381 = vector.load %arg9[%c3_114, %c0_115] : memref<22x128xf32, #tpu.memory_space<vmem>>, vector<16x128xf32>
      %c3_i32_116 = arith.constant 3 : i32
      %382 = tpu.dynamic_rotate %381 by %c3_i32_116 dim 1 : vector<16x128xf32>, i32 -> vector<16x128xf32>
      %c70 = arith.constant 70 : index
      %383 = memref.load %arg3[%c70] : memref<98xf32, #tpu.memory_space<smem>>
      %384 = vector.broadcast %383 : f32 to vector<16x128xf32>
      %385 = arith.mulf %384, %382 : vector<16x128xf32>
      %386 = arith.addf %380, %385 : vector<16x128xf32>
      %c2_i32_117 = arith.constant 2 : i32
      %387 = tpu.dynamic_rotate %381 by %c2_i32_117 dim 1 : vector<16x128xf32>, i32 -> vector<16x128xf32>
      %c71 = arith.constant 71 : index
      %388 = memref.load %arg3[%c71] : memref<98xf32, #tpu.memory_space<smem>>
      %389 = vector.broadcast %388 : f32 to vector<16x128xf32>
      %390 = arith.mulf %389, %387 : vector<16x128xf32>
      %391 = arith.addf %386, %390 : vector<16x128xf32>
      %c1_i32_118 = arith.constant 1 : i32
      %392 = tpu.dynamic_rotate %381 by %c1_i32_118 dim 1 : vector<16x128xf32>, i32 -> vector<16x128xf32>
      %c72 = arith.constant 72 : index
      %393 = memref.load %arg3[%c72] : memref<98xf32, #tpu.memory_space<smem>>
      %394 = vector.broadcast %393 : f32 to vector<16x128xf32>
      %395 = arith.mulf %394, %392 : vector<16x128xf32>
      %396 = arith.addf %391, %395 : vector<16x128xf32>
      %c73 = arith.constant 73 : index
      %397 = memref.load %arg3[%c73] : memref<98xf32, #tpu.memory_space<smem>>
      %398 = vector.broadcast %397 : f32 to vector<16x128xf32>
      %399 = arith.mulf %398, %381 : vector<16x128xf32>
      %400 = arith.addf %396, %399 : vector<16x128xf32>
      %c127_i32_119 = arith.constant 127 : i32
      %401 = tpu.dynamic_rotate %381 by %c127_i32_119 dim 1 : vector<16x128xf32>, i32 -> vector<16x128xf32>
      %c74 = arith.constant 74 : index
      %402 = memref.load %arg3[%c74] : memref<98xf32, #tpu.memory_space<smem>>
      %403 = vector.broadcast %402 : f32 to vector<16x128xf32>
      %404 = arith.mulf %403, %401 : vector<16x128xf32>
      %405 = arith.addf %400, %404 : vector<16x128xf32>
      %c126_i32_120 = arith.constant 126 : i32
      %406 = tpu.dynamic_rotate %381 by %c126_i32_120 dim 1 : vector<16x128xf32>, i32 -> vector<16x128xf32>
      %c75 = arith.constant 75 : index
      %407 = memref.load %arg3[%c75] : memref<98xf32, #tpu.memory_space<smem>>
      %408 = vector.broadcast %407 : f32 to vector<16x128xf32>
      %409 = arith.mulf %408, %406 : vector<16x128xf32>
      %410 = arith.addf %405, %409 : vector<16x128xf32>
      %c125_i32_121 = arith.constant 125 : i32
      %411 = tpu.dynamic_rotate %381 by %c125_i32_121 dim 1 : vector<16x128xf32>, i32 -> vector<16x128xf32>
      %c76 = arith.constant 76 : index
      %412 = memref.load %arg3[%c76] : memref<98xf32, #tpu.memory_space<smem>>
      %413 = vector.broadcast %412 : f32 to vector<16x128xf32>
      %414 = arith.mulf %413, %411 : vector<16x128xf32>
      %415 = arith.addf %410, %414 : vector<16x128xf32>
      %c4_122 = arith.constant 4 : index
      %c0_123 = arith.constant 0 : index
      %416 = vector.load %arg9[%c4_122, %c0_123] : memref<22x128xf32, #tpu.memory_space<vmem>>, vector<16x128xf32>
      %c3_i32_124 = arith.constant 3 : i32
      %417 = tpu.dynamic_rotate %416 by %c3_i32_124 dim 1 : vector<16x128xf32>, i32 -> vector<16x128xf32>
      %c77 = arith.constant 77 : index
      %418 = memref.load %arg3[%c77] : memref<98xf32, #tpu.memory_space<smem>>
      %419 = vector.broadcast %418 : f32 to vector<16x128xf32>
      %420 = arith.mulf %419, %417 : vector<16x128xf32>
      %421 = arith.addf %415, %420 : vector<16x128xf32>
      %c2_i32_125 = arith.constant 2 : i32
      %422 = tpu.dynamic_rotate %416 by %c2_i32_125 dim 1 : vector<16x128xf32>, i32 -> vector<16x128xf32>
      %c78 = arith.constant 78 : index
      %423 = memref.load %arg3[%c78] : memref<98xf32, #tpu.memory_space<smem>>
      %424 = vector.broadcast %423 : f32 to vector<16x128xf32>
      %425 = arith.mulf %424, %422 : vector<16x128xf32>
      %426 = arith.addf %421, %425 : vector<16x128xf32>
      %c1_i32_126 = arith.constant 1 : i32
      %427 = tpu.dynamic_rotate %416 by %c1_i32_126 dim 1 : vector<16x128xf32>, i32 -> vector<16x128xf32>
      %c79 = arith.constant 79 : index
      %428 = memref.load %arg3[%c79] : memref<98xf32, #tpu.memory_space<smem>>
      %429 = vector.broadcast %428 : f32 to vector<16x128xf32>
      %430 = arith.mulf %429, %427 : vector<16x128xf32>
      %431 = arith.addf %426, %430 : vector<16x128xf32>
      %c80 = arith.constant 80 : index
      %432 = memref.load %arg3[%c80] : memref<98xf32, #tpu.memory_space<smem>>
      %433 = vector.broadcast %432 : f32 to vector<16x128xf32>
      %434 = arith.mulf %433, %416 : vector<16x128xf32>
      %435 = arith.addf %431, %434 : vector<16x128xf32>
      %c127_i32_127 = arith.constant 127 : i32
      %436 = tpu.dynamic_rotate %416 by %c127_i32_127 dim 1 : vector<16x128xf32>, i32 -> vector<16x128xf32>
      %c81 = arith.constant 81 : index
      %437 = memref.load %arg3[%c81] : memref<98xf32, #tpu.memory_space<smem>>
      %438 = vector.broadcast %437 : f32 to vector<16x128xf32>
      %439 = arith.mulf %438, %436 : vector<16x128xf32>
      %440 = arith.addf %435, %439 : vector<16x128xf32>
      %c126_i32_128 = arith.constant 126 : i32
      %441 = tpu.dynamic_rotate %416 by %c126_i32_128 dim 1 : vector<16x128xf32>, i32 -> vector<16x128xf32>
      %c82 = arith.constant 82 : index
      %442 = memref.load %arg3[%c82] : memref<98xf32, #tpu.memory_space<smem>>
      %443 = vector.broadcast %442 : f32 to vector<16x128xf32>
      %444 = arith.mulf %443, %441 : vector<16x128xf32>
      %445 = arith.addf %440, %444 : vector<16x128xf32>
      %c125_i32_129 = arith.constant 125 : i32
      %446 = tpu.dynamic_rotate %416 by %c125_i32_129 dim 1 : vector<16x128xf32>, i32 -> vector<16x128xf32>
      %c83 = arith.constant 83 : index
      %447 = memref.load %arg3[%c83] : memref<98xf32, #tpu.memory_space<smem>>
      %448 = vector.broadcast %447 : f32 to vector<16x128xf32>
      %449 = arith.mulf %448, %446 : vector<16x128xf32>
      %450 = arith.addf %445, %449 : vector<16x128xf32>
      %c5_130 = arith.constant 5 : index
      %c0_131 = arith.constant 0 : index
      %451 = vector.load %arg9[%c5_130, %c0_131] : memref<22x128xf32, #tpu.memory_space<vmem>>, vector<16x128xf32>
      %c3_i32_132 = arith.constant 3 : i32
      %452 = tpu.dynamic_rotate %451 by %c3_i32_132 dim 1 : vector<16x128xf32>, i32 -> vector<16x128xf32>
      %c84 = arith.constant 84 : index
      %453 = memref.load %arg3[%c84] : memref<98xf32, #tpu.memory_space<smem>>
      %454 = vector.broadcast %453 : f32 to vector<16x128xf32>
      %455 = arith.mulf %454, %452 : vector<16x128xf32>
      %456 = arith.addf %450, %455 : vector<16x128xf32>
      %c2_i32_133 = arith.constant 2 : i32
      %457 = tpu.dynamic_rotate %451 by %c2_i32_133 dim 1 : vector<16x128xf32>, i32 -> vector<16x128xf32>
      %c85 = arith.constant 85 : index
      %458 = memref.load %arg3[%c85] : memref<98xf32, #tpu.memory_space<smem>>
      %459 = vector.broadcast %458 : f32 to vector<16x128xf32>
      %460 = arith.mulf %459, %457 : vector<16x128xf32>
      %461 = arith.addf %456, %460 : vector<16x128xf32>
      %c1_i32_134 = arith.constant 1 : i32
      %462 = tpu.dynamic_rotate %451 by %c1_i32_134 dim 1 : vector<16x128xf32>, i32 -> vector<16x128xf32>
      %c86 = arith.constant 86 : index
      %463 = memref.load %arg3[%c86] : memref<98xf32, #tpu.memory_space<smem>>
      %464 = vector.broadcast %463 : f32 to vector<16x128xf32>
      %465 = arith.mulf %464, %462 : vector<16x128xf32>
      %466 = arith.addf %461, %465 : vector<16x128xf32>
      %c87 = arith.constant 87 : index
      %467 = memref.load %arg3[%c87] : memref<98xf32, #tpu.memory_space<smem>>
      %468 = vector.broadcast %467 : f32 to vector<16x128xf32>
      %469 = arith.mulf %468, %451 : vector<16x128xf32>
      %470 = arith.addf %466, %469 : vector<16x128xf32>
      %c127_i32_135 = arith.constant 127 : i32
      %471 = tpu.dynamic_rotate %451 by %c127_i32_135 dim 1 : vector<16x128xf32>, i32 -> vector<16x128xf32>
      %c88 = arith.constant 88 : index
      %472 = memref.load %arg3[%c88] : memref<98xf32, #tpu.memory_space<smem>>
      %473 = vector.broadcast %472 : f32 to vector<16x128xf32>
      %474 = arith.mulf %473, %471 : vector<16x128xf32>
      %475 = arith.addf %470, %474 : vector<16x128xf32>
      %c126_i32_136 = arith.constant 126 : i32
      %476 = tpu.dynamic_rotate %451 by %c126_i32_136 dim 1 : vector<16x128xf32>, i32 -> vector<16x128xf32>
      %c89 = arith.constant 89 : index
      %477 = memref.load %arg3[%c89] : memref<98xf32, #tpu.memory_space<smem>>
      %478 = vector.broadcast %477 : f32 to vector<16x128xf32>
      %479 = arith.mulf %478, %476 : vector<16x128xf32>
      %480 = arith.addf %475, %479 : vector<16x128xf32>
      %c125_i32_137 = arith.constant 125 : i32
      %481 = tpu.dynamic_rotate %451 by %c125_i32_137 dim 1 : vector<16x128xf32>, i32 -> vector<16x128xf32>
      %c90 = arith.constant 90 : index
      %482 = memref.load %arg3[%c90] : memref<98xf32, #tpu.memory_space<smem>>
      %483 = vector.broadcast %482 : f32 to vector<16x128xf32>
      %484 = arith.mulf %483, %481 : vector<16x128xf32>
      %485 = arith.addf %480, %484 : vector<16x128xf32>
      %c6_138 = arith.constant 6 : index
      %c0_139 = arith.constant 0 : index
      %486 = vector.load %arg9[%c6_138, %c0_139] : memref<22x128xf32, #tpu.memory_space<vmem>>, vector<16x128xf32>
      %c3_i32_140 = arith.constant 3 : i32
      %487 = tpu.dynamic_rotate %486 by %c3_i32_140 dim 1 : vector<16x128xf32>, i32 -> vector<16x128xf32>
      %c91 = arith.constant 91 : index
      %488 = memref.load %arg3[%c91] : memref<98xf32, #tpu.memory_space<smem>>
      %489 = vector.broadcast %488 : f32 to vector<16x128xf32>
      %490 = arith.mulf %489, %487 : vector<16x128xf32>
      %491 = arith.addf %485, %490 : vector<16x128xf32>
      %c2_i32_141 = arith.constant 2 : i32
      %492 = tpu.dynamic_rotate %486 by %c2_i32_141 dim 1 : vector<16x128xf32>, i32 -> vector<16x128xf32>
      %c92 = arith.constant 92 : index
      %493 = memref.load %arg3[%c92] : memref<98xf32, #tpu.memory_space<smem>>
      %494 = vector.broadcast %493 : f32 to vector<16x128xf32>
      %495 = arith.mulf %494, %492 : vector<16x128xf32>
      %496 = arith.addf %491, %495 : vector<16x128xf32>
      %c1_i32_142 = arith.constant 1 : i32
      %497 = tpu.dynamic_rotate %486 by %c1_i32_142 dim 1 : vector<16x128xf32>, i32 -> vector<16x128xf32>
      %c93 = arith.constant 93 : index
      %498 = memref.load %arg3[%c93] : memref<98xf32, #tpu.memory_space<smem>>
      %499 = vector.broadcast %498 : f32 to vector<16x128xf32>
      %500 = arith.mulf %499, %497 : vector<16x128xf32>
      %501 = arith.addf %496, %500 : vector<16x128xf32>
      %c94 = arith.constant 94 : index
      %502 = memref.load %arg3[%c94] : memref<98xf32, #tpu.memory_space<smem>>
      %503 = vector.broadcast %502 : f32 to vector<16x128xf32>
      %504 = arith.mulf %503, %486 : vector<16x128xf32>
      %505 = arith.addf %501, %504 : vector<16x128xf32>
      %c127_i32_143 = arith.constant 127 : i32
      %506 = tpu.dynamic_rotate %486 by %c127_i32_143 dim 1 : vector<16x128xf32>, i32 -> vector<16x128xf32>
      %c95 = arith.constant 95 : index
      %507 = memref.load %arg3[%c95] : memref<98xf32, #tpu.memory_space<smem>>
      %508 = vector.broadcast %507 : f32 to vector<16x128xf32>
      %509 = arith.mulf %508, %506 : vector<16x128xf32>
      %510 = arith.addf %505, %509 : vector<16x128xf32>
      %c126_i32_144 = arith.constant 126 : i32
      %511 = tpu.dynamic_rotate %486 by %c126_i32_144 dim 1 : vector<16x128xf32>, i32 -> vector<16x128xf32>
      %c96 = arith.constant 96 : index
      %512 = memref.load %arg3[%c96] : memref<98xf32, #tpu.memory_space<smem>>
      %513 = vector.broadcast %512 : f32 to vector<16x128xf32>
      %514 = arith.mulf %513, %511 : vector<16x128xf32>
      %515 = arith.addf %510, %514 : vector<16x128xf32>
      %c125_i32_145 = arith.constant 125 : i32
      %516 = tpu.dynamic_rotate %486 by %c125_i32_145 dim 1 : vector<16x128xf32>, i32 -> vector<16x128xf32>
      %c97 = arith.constant 97 : index
      %517 = memref.load %arg3[%c97] : memref<98xf32, #tpu.memory_space<smem>>
      %518 = vector.broadcast %517 : f32 to vector<16x128xf32>
      %519 = arith.mulf %518, %516 : vector<16x128xf32>
      %520 = arith.addf %515, %519 : vector<16x128xf32>
      %c0_146 = arith.constant 0 : index
      %521 = memref.load %arg4[%c0_146] : memref<1xf32, #tpu.memory_space<smem>>
      %522 = vector.broadcast %521 : f32 to vector<16x128xf32>
      %523 = arith.addf %520, %522 : vector<16x128xf32>
      %cst_147 = arith.constant 0.000000e+00 : f32
      %524 = vector.broadcast %cst_147 : f32 to vector<16x128xf32>
      %525 = arith.maximumf %523, %524 : vector<16x128xf32>
      %cst_148 = arith.constant 0.000000e+00 : f32
      %526 = vector.broadcast %cst_148 : f32 to vector<16x128xf32>
      %527 = arith.subf %526, %525 : vector<16x128xf32>
      %528 = math.exp %527 : vector<16x128xf32>
      %cst_149 = arith.constant 1.000000e+00 : f32
      %529 = vector.broadcast %cst_149 : f32 to vector<16x128xf32>
      %530 = arith.addf %529, %528 : vector<16x128xf32>
      %cst_150 = arith.constant 1.000000e+00 : f32
      %531 = vector.broadcast %cst_150 : f32 to vector<16x128xf32>
      %532 = arith.divf %531, %530 : vector<16x128xf32>
      %c0_151 = arith.constant 0 : index
      %c0_152 = arith.constant 0 : index
      %c0_153 = arith.constant 0 : index
      %533 = vector.load %arg5[%c0_151, %c0_152, %c0_153] : memref<1x16x128xf32, #tpu.memory_space<vmem>>, vector<1x16x128xf32>
      %534 = vector.shape_cast %533 : vector<1x16x128xf32> to vector<16x128xf32>
      %535 = vector.shape_cast %532 : vector<16x128xf32> to vector<1x16x128xf32>
      tpu.vector_store %arg5[%c0_151, %c0_152, %c0_153], %535 {strides = array<i32>} : memref<1x16x128xf32, #tpu.memory_space<vmem>>, vector<1x16x128xf32>,
    } else {
    }
    return
  }
  func.func @transform_0(%arg0: i32, %arg1: i32) -> (i32, i32, i32, i32) {
    %c0_i32 = arith.constant 0 : i32
    %c0_i32_0 = arith.constant 0 : i32
    %c0_i32_1 = arith.constant 0 : i32
    return %arg0, %arg1, %c0_i32, %c0_i32_0 : i32, i32, i32, i32
  }
  func.func @transform_1(%arg0: i32, %arg1: i32) -> i32 {
    %c0_i32 = arith.constant 0 : i32
    %c0_i32_0 = arith.constant 0 : i32
    return %c0_i32 : i32
  }
  func.func @transform_2(%arg0: i32, %arg1: i32) -> i32 {
    %c0_i32 = arith.constant 0 : i32
    %c0_i32_0 = arith.constant 0 : i32
    return %c0_i32 : i32
  }
  func.func @transform_3(%arg0: i32, %arg1: i32) -> (i32, i32, i32) {
    %c0_i32 = arith.constant 0 : i32
    %c0_i32_0 = arith.constant 0 : i32
    %c0_i32_1 = arith.constant 0 : i32
    return %arg0, %c0_i32, %c0_i32_0 : i32, i32, i32
  }
}

</mosaic_0001>

<llo_original>
// kernel: tpu_custom_call.1
$region0: #{tpu_custom_call.1}
  #allocation0 [shape = 'u32[]', space=smem, size = 0x4, offset = 0x4, fixed_abs, tag = 'smem constant byte address 0x4 - core index']
  #allocation1 [shape = 'u32[144,128]{1,0:T(1,128)}', space=vmem, size = 0x12000, scoped, tag = 'internal scratch']
  #allocation2 [shape = 'f32[16,16]{1,0:T(8,128)}', space=vmem, size = 0x2000, scoped, tag = 'scratch operand']
  #allocation3 [shape = 'f32[16,16]{1,0:T(8,128)}', space=vmem, size = 0x2000, scoped, tag = 'scratch operand']
  #allocation4 [shape = 'f32[22,128]{1,0:T(8,128)}', space=vmem, size = 0x3000, scoped, tag = 'scratch operand']
  #allocation5 [shape = 'f32[22,128]{1,0:T(8,128)}', space=vmem, size = 0x3000, scoped, tag = 'scratch operand']
  #allocation6 [shape = 'f32[1]{0:T(128)S(6)}', space=smem, size = 0x200, scoped, tag = 'scoped memory for tpu_custom_call.1']
  %s0 = inlined_call_operand.hbm [shape: f32[2,8,16,16], index: 0, kind: input, shape index: {}]
  %s1 = inlined_call_operand.vmem [shape: f32[98], index: 1, kind: input, shape index: {}]
  %s2 = inlined_call_operand.<no memory space> [shape: f32[1], index: 2, kind: input, shape index: {}]
  %s3 = inlined_call_operand.hbm [shape: f32[2,16,128], index: 3, kind: output, shape index: {}]
  %s4 = sld [smem:[#allocation0]]
  $region61: #{tpu_custom_call.1} parent=0
    _
  %s6 = ssub.s32 1, %s4
  %s7 = scalar_select 0, %s6, %s4
  %8 = sst [smem:[#allocation6]] %s2
  $region1: #{tpu_custom_call.1} parent=0
    #allocation7 [shape = 'u8[131072]{0}', space=vmem, size = 0x20000, scoped, tag = 'input window, operand 0']
    #allocation8 [shape = 's32[2]{0}', space=sflag, size = 0x8, scoped, tag = 'scoped memory for tpu_custom_call.1']
    #allocation9 [shape = 's32[2]{0}', space=sflag, size = 0x8, scoped, tag = 'scoped memory for tpu_custom_call.1']
    #allocation10 [shape = 's32[2]{0}', space=sflag, size = 0x8, scoped, tag = 'scoped memory for tpu_custom_call.1']
    #allocation11 [shape = 'u8[512]{0}', space=smem, size = 0x200, scoped, tag = 'input window, operand 1, single buffered']
    #allocation12 [shape = 'u8[16384]{0}', space=vmem, size = 0x4000, scoped, tag = 'output window, operand 0']
    %9 = vsyncpa [#allocation8], 0
    %s10 = scalar_lea.sflag [#allocation8], 1
    %11 = vsyncpa %s10, 0
    %12 = vsyncpa [#allocation10], 0
    %13 = vsyncpa [#allocation9], 0
    %s14 = scalar_lea.sflag [#allocation9], 1
    %15 = vsyncpa %s14, 0
    loop: start=0, step=1, limit=4
    $region2: #{tpu_custom_call.1} parent=1 // loop_pre_header
      _
    $region3: #{tpu_custom_call.1} parent=1 // loop_header
      %s17 = sphi 0, %s21
      %p18 = scmp.ge.s32.totalorder %s17, 4
      %s24 = sphi 0, %s36
      %s25 = sphi 0, %s32
      %s26 = sphi 0, %s24
      %s27 = sphi 0, %s25
      %s28 = sphi 0, %s26
      %s29 = sphi 0, %s27
      %s41 = sphi 0, %s43
      %s44 = sphi 0, %s41
      %s45 = sphi 0, %s44
      %s61 = sphi 0, %s45
      %s65 = sphi 0, %s65
      %s67 = sphi 0, %s65
      %s68 = sphi 0, %s67
      %s82 = sphi 0, %s68
      %s86 = sphi 0, %s86
      %s88 = sphi 0, %s86
      %s89 = sphi 0, %s88
      %s103 = sphi 0, %s89
      %s109 = sphi 0, %s111
      %s112 = sphi 0, %s109
      %s113 = sphi 0, %s112
      %s129 = sphi 0, %s113
    $region4: #{tpu_custom_call.1} parent=1 // loop_header_branch
      %20 = sbr.rel (%p18) target = $region8
    $region5: #{tpu_custom_call.1} parent=1 // loop_body
      %s22 = ssub.s32 %s17, 1
      %s23 = ssub.s32 %s17, 2
      %s30 = sadd.s32 1, %s25
      %p31 = scmp.ge.s32.totalorder %s30, 1
      %s32 = scalar_select %p31, 0, %s30
      %s33 = sadd.s32 1, %s24
      %s34 = scalar_select %p31, %s33, %s24
      %p35 = scmp.ge.s32.totalorder %s34, 2
      %s36 = scalar_select %p35, 0, %s34
      %s37 = ssub.s32 %s24, %s36
      %s38 = ssub.s32 %s25, %s32
      %s39 = sor.u32 %s37, %s38
      %p40 = scmp.eq.s32.totalorder %s39, 0
      %s42 = sadd.s32 %s41, 1
      %s43 = scalar_select %p40, %s41, %s42
      %p46 = pneg %p40
      %p47 = scmp.eq.s32.totalorder %s17, 1
      %p48 = por %p46, %p47
      %p49 = scmp.ne.s32.totalorder %s41, %s44
      %p50 = scmp.eq.s32.totalorder %s17, 0
      %p51 = por %p49, %p50
      %p52 = scmp.ne.s32.totalorder %s41, %s44
      %p53 = scmp.eq.s32.totalorder %s22, 1
      %p54 = por %p52, %p53
      %p55 = scmp.ne.s32.totalorder %s44, %s45
      %p56 = scmp.eq.s32.totalorder %s22, 0
      %p57 = por %p55, %p56
      %p58 = scmp.ne.s32.totalorder %s44, %s45
      %p59 = scmp.eq.s32.totalorder %s23, 1
      %p60 = por %p58, %p59
      %p62 = scmp.ne.s32.totalorder %s45, %s61
      %p63 = scmp.eq.s32.totalorder %s23, 0
      %p64 = por %p62, %p63
      %s66 = sadd.s32 %s65, 1
      %p69 = scmp.eq.s32.totalorder %s17, 1
      %p70 = scmp.ne.s32.totalorder %s65, %s67
      %p71 = scmp.eq.s32.totalorder %s17, 0
      %p72 = por %p70, %p71
      %p73 = scmp.ne.s32.totalorder %s65, %s67
      %p74 = scmp.eq.s32.totalorder %s22, 1
      %p75 = por %p73, %p74
      %p76 = scmp.ne.s32.totalorder %s67, %s68
      %p77 = scmp.eq.s32.totalorder %s22, 0
      %p78 = por %p76, %p77
      %p79 = scmp.ne.s32.totalorder %s67, %s68
      %p80 = scmp.eq.s32.totalorder %s23, 1
      %p81 = por %p79, %p80
      %p83 = scmp.ne.s32.totalorder %s68, %s82
      %p84 = scmp.eq.s32.totalorder %s23, 0
      %p85 = por %p83, %p84
      %s87 = sadd.s32 %s86, 1
      %p90 = scmp.eq.s32.totalorder %s17, 1
      %p91 = scmp.ne.s32.totalorder %s86, %s88
      %p92 = scmp.eq.s32.totalorder %s17, 0
      %p93 = por %p91, %p92
      %p94 = scmp.ne.s32.totalorder %s86, %s88
      %p95 = scmp.eq.s32.totalorder %s22, 1
      %p96 = por %p94, %p95
      %p97 = scmp.ne.s32.totalorder %s88, %s89
      %p98 = scmp.eq.s32.totalorder %s22, 0
      %p99 = por %p97, %p98
      %p100 = scmp.ne.s32.totalorder %s88, %s89
      %p101 = scmp.eq.s32.totalorder %s23, 1
      %p102 = por %p100, %p101
      %p104 = scmp.ne.s32.totalorder %s89, %s103
      %p105 = scmp.eq.s32.totalorder %s23, 0
      %p106 = por %p104, %p105
      %s107 = ssub.s32 %s24, %s36
      %p108 = scmp.eq.s32.totalorder %s107, 0
      %s110 = sadd.s32 %s109, 1
      %s111 = scalar_select %p108, %s109, %s110
      %p114 = pneg %p108
      %p115 = scmp.eq.s32.totalorder %s17, 1
      %p116 = por %p114, %p115
      %p117 = scmp.ne.s32.totalorder %s109, %s112
      %p118 = scmp.eq.s32.totalorder %s17, 0
      %p119 = por %p117, %p118
      %p120 = scmp.ne.s32.totalorder %s109, %s112
      %p121 = scmp.eq.s32.totalorder %s22, 1
      %p122 = por %p120, %p121
      %p123 = scmp.ne.s32.totalorder %s112, %s113
      %p124 = scmp.eq.s32.totalorder %s22, 0
      %p125 = por %p123, %p124
      %p126 = scmp.ne.s32.totalorder %s112, %s113
      %p127 = scmp.eq.s32.totalorder %s23, 1
      %p128 = por %p126, %p127
      %p130 = scmp.ne.s32.totalorder %s113, %s129
      %p131 = scmp.eq.s32.totalorder %s23, 0
      %p132 = por %p130, %p131
      %p133 = scmp.le.s32.totalorder 1, %s17
      %p134 = scmp.lt.s32.totalorder %s17, 3
      %p135 = pnand %p133, %p134
      %p136 = pneg %p135
      // Predicated region
      $region9: #{tpu_custom_call.1} parent=5 // pred_check
        _
      $region10: #{tpu_custom_call.1} parent=5 // pred_check_branch
        %138 = sbr.rel (%p135) target = $region12
      $region11: #{tpu_custom_call.1} parent=5 // pred_region
        %s139 = ssub.s32 %s17, 1
        // Predicated region
        $region13: #{tpu_custom_call.1} parent=11 // pred_check
          %p140 = pneg %p78
        $region14: #{tpu_custom_call.1} parent=11 // pred_check_branch
          %142 = sbr.rel (%p140) target = $region16
        $region15: #{tpu_custom_call.1} parent=11 // pred_region
          %s144 = ssub.s32 16, 16
          %145 = vsyncadd [#allocation10], %s144
          %s147 = sshll.u32 %s1, 4
          %s148 = int_to_ptr.vmem [resolvable:$true] %s147
          %150 = dma.vmem_to_smem %s148, 16, [#allocation11], [#allocation10]
        $region16: #{tpu_custom_call.1} parent=11 // pred_fallthru
          _
        // Predicated region
        $region17: #{tpu_custom_call.1} parent=11 // pred_check
          %p151 = pneg %p99
        $region18: #{tpu_custom_call.1} parent=11 // pred_check_branch
          %153 = sbr.rel (%p151) target = $region20
        $region19: #{tpu_custom_call.1} parent=11 // pred_region
          _
        $region20: #{tpu_custom_call.1} parent=11 // pred_fallthru
          _
      $region12: #{tpu_custom_call.1} parent=5 // pred_fallthru
        _
      %p154 = scmp.lt.s32.totalorder %s17, 2
      // Predicated region
      $region21: #{tpu_custom_call.1} parent=5 // pred_check
        %p155 = pneg %p154
      $region22: #{tpu_custom_call.1} parent=5 // pred_check_branch
        %157 = sbr.rel (%p155) target = $region24
      $region23: #{tpu_custom_call.1} parent=5 // pred_region
        // Predicated region
        $region25: #{tpu_custom_call.1} parent=23 // pred_check
          %p158 = pneg %p51
        $region26: #{tpu_custom_call.1} parent=23 // pred_check_branch
          %160 = sbr.rel (%p158) target = $region28
        $region27: #{tpu_custom_call.1} parent=23 // pred_region
          %s161 = sand.u32 %s41, 1
          %s162 = scalar_lea.sflag [#allocation8], %s161
          %s163 = sand.u32 %s41, 1
          %s164 = smul.addr %s163, 128
          %s165 = scalar_lea.vmem [#allocation7], %s164
          %s166 = smul.u32 8, %s25
          %s168 = ssub.s32 2048, 2048
          %169 = vsyncadd %s162, %s168
          %s170 = smul.addr %s166, 2
          %s171 = smul.addr %s24, 16
          %s172 = sadd.s32 %s170, %s171
          %s173 = smul.addr %s172, 128
          %s174 = scalar_lea.hbm %s0, %s173
          %s175 = sshll.u32 %s165, 4
          %s176 = int_to_ptr.vmem [resolvable:$true] %s175
          %181 = dma.hbm_to_vmem [thread:$0]  %s174, 2048, %s176, %s162, 128, 128, 8
        $region28: #{tpu_custom_call.1} parent=23 // pred_fallthru
          _
      $region24: #{tpu_custom_call.1} parent=5 // pred_fallthru
        _
      %p182 = scmp.le.s32.totalorder 1, %s17
      %p183 = scmp.lt.s32.totalorder %s17, 3
      %p184 = pnand %p182, %p183
      %p185 = pneg %p184
      // Predicated region
      $region29: #{tpu_custom_call.1} parent=5 // pred_check
        _
      $region30: #{tpu_custom_call.1} parent=5 // pred_check_branch
        %187 = sbr.rel (%p184) target = $region32
      $region31: #{tpu_custom_call.1} parent=5 // pred_region
        %s188 = ssub.s32 %s17, 1
        %s189 = sand.u32 %s44, 1
        %s190 = scalar_lea.sflag [#allocation8], %s189
        %s191 = sand.u32 %s44, 1
        %s192 = smul.addr %s191, 128
        %s193 = scalar_lea.vmem [#allocation7], %s192
        // Predicated region
        $region33: #{tpu_custom_call.1} parent=31 // pred_check
          %p194 = pneg %p57
        $region34: #{tpu_custom_call.1} parent=31 // pred_check_branch
          %196 = sbr.rel (%p194) target = $region36
        $region35: #{tpu_custom_call.1} parent=31 // pred_region
          %197 = dma.done %s190, 2048
        $region36: #{tpu_custom_call.1} parent=31 // pred_fallthru
          _
        // Predicated region
        $region37: #{tpu_custom_call.1} parent=31 // pred_check
          %p198 = pneg %p78
        $region38: #{tpu_custom_call.1} parent=31 // pred_check_branch
          %200 = sbr.rel (%p198) target = $region40
        $region39: #{tpu_custom_call.1} parent=31 // pred_region
          %201 = dma.done [#allocation10], 16
        $region40: #{tpu_custom_call.1} parent=31 // pred_fallthru
          _
        %202 = sfence
        %s203 = sand.u32 %s44, 1
        %s204 = scalar_lea.sflag [#allocation8], %s203
        %s205 = sand.u32 %s44, 1
        %s206 = smul.addr %s205, 128
        %s207 = scalar_lea.vmem [#allocation7], %s206
        %p208 = pneg %p57
        %p209 = pneg %p54
        %p210 = pneg %p78
        %p211 = pneg %p75
        %p212 = pneg %p99
        %p213 = pneg %p96
        %p214 = pneg %p125
        %p215 = pneg %p122
        %s216 = sand.u32 %s112, 1
        %s217 = scalar_lea.sflag [#allocation9], %s216
        %s218 = sand.u32 %s112, 1
        %s219 = smul.addr %s218, 16
        %s220 = scalar_lea.vmem [#allocation12], %s219
        %s221 = smul.u32 8, %s27
        %v222 = vld [vmem:[%s193] sm:$0xff]
        %v223 = vld [vmem:[%s193 + $0x8] sm:$0xff]
        %v224 = vld [vmem:[%s193 + $0x10] sm:$0xff]
        %v225 = vld [vmem:[%s193 + $0x18] sm:$0xff]
        %v226 = vld [vmem:[%s193 + $0x20] sm:$0xff]
        %v227 = vld [vmem:[%s193 + $0x28] sm:$0xff]
        %v228 = vld [vmem:[%s193 + $0x30] sm:$0xff]
        %v229 = vld [vmem:[%s193 + $0x38] sm:$0xff]
        %v230 = vld [vmem:[%s193 + $0x40] sm:$0xff]
        %v231 = vld [vmem:[%s193 + $0x48] sm:$0xff]
        %v232 = vld [vmem:[%s193 + $0x50] sm:$0xff]
        %v233 = vld [vmem:[%s193 + $0x58] sm:$0xff]
        %v234 = vld [vmem:[%s193 + $0x60] sm:$0xff]
        %v235 = vld [vmem:[%s193 + $0x68] sm:$0xff]
        %v236 = vld [vmem:[%s193 + $0x70] sm:$0xff]
        %v237 = vld [vmem:[%s193 + $0x78] sm:$0xff]
        %vm238 = vcmask 130048
        %v239 = vsel %vm238, %v222, -inf
        %v240 = vsel %vm238, %v224, -inf
        %v241 = vsel %vm238, %v226, -inf
        %v242 = vmax.f32 %v239, %v241
        %v243 = vsel %vm238, %v228, -inf
        %v244 = vmax.f32 %v240, %v243
        %v245 = vsel %vm238, %v230, -inf
        %v246 = vmax.f32 %v242, %v245
        %v247 = vsel %vm238, %v232, -inf
        %v248 = vmax.f32 %v244, %v247
        %v249 = vsel %vm238, %v234, -inf
        %v250 = vmax.f32 %v246, %v249
        %v251 = vsel %vm238, %v236, -inf
        %v252 = vmax.f32 %v248, %v251
        %v253 = vmax.f32 %v250, %v252
        %v254 = vsel %vm238, %v223, -inf
        %v255 = vsel %vm238, %v225, -inf
        %v256 = vsel %vm238, %v227, -inf
        %v257 = vmax.f32 %v254, %v256
        %v258 = vsel %vm238, %v229, -inf
        %v259 = vmax.f32 %v255, %v258
        %v260 = vsel %vm238, %v231, -inf
        %v261 = vmax.f32 %v257, %v260
        %v262 = vsel %vm238, %v233, -inf
        %v263 = vmax.f32 %v259, %v262
        %v264 = vsel %vm238, %v235, -inf
        %v265 = vmax.f32 %v261, %v264
        %v266 = vsel %vm238, %v237, -inf
        %v267 = vmax.f32 %v263, %v266
        %v268 = vmax.f32 %v265, %v267
        %v269 = vsel %vm238, %v222, 0.0
        %v270 = vsel %vm238, %v224, 0.0
        %v271 = vadd.f32 %v269, %v270
        %v272 = vsel %vm238, %v226, 0.0
        %v273 = vadd.f32 %v271, %v272
        %v274 = vsel %vm238, %v228, 0.0
        %v275 = vadd.f32 %v273, %v274
        %v276 = vsel %vm238, %v230, 0.0
        %v277 = vadd.f32 %v275, %v276
        %v278 = vsel %vm238, %v232, 0.0
        %v279 = vadd.f32 %v277, %v278
        %v280 = vsel %vm238, %v234, 0.0
        %v281 = vadd.f32 %v279, %v280
        %v282 = vsel %vm238, %v236, 0.0
        %v283 = vadd.f32 %v281, %v282
        %v284 = vsel %vm238, %v223, 0.0
        %v285 = vsel %vm238, %v225, 0.0
        %v286 = vadd.f32 %v284, %v285
        %v287 = vsel %vm238, %v227, 0.0
        %v288 = vadd.f32 %v286, %v287
        %v289 = vsel %vm238, %v229, 0.0
        %v290 = vadd.f32 %v288, %v289
        %v291 = vsel %vm238, %v231, 0.0
        %v292 = vadd.f32 %v290, %v291
        %v293 = vsel %vm238, %v233, 0.0
        %v294 = vadd.f32 %v292, %v293
        %v295 = vsel %vm238, %v235, 0.0
        %v296 = vadd.f32 %v294, %v295
        %v297 = vsel %vm238, %v237, 0.0
        %v298 = vadd.f32 %v296, %v297
        %p299 = scmp.eq.s32.totalorder %s27, 0
        // Predicated region
        $region41: #{tpu_custom_call.1} parent=31 // pred_check
          %p300 = pneg %p299
        $region42: #{tpu_custom_call.1} parent=31 // pred_check_branch
          %302 = sbr.rel (%p300) target = $region44
        $region43: #{tpu_custom_call.1} parent=31 // pred_region
          %303 = vst.msk [vmem:[#allocation2] sm:$0xff] %vm238, -inf
          %304 = vst.msk [vmem:[#allocation2 + $0x8] sm:$0xff] %vm238, -inf
          %305 = vst.msk [vmem:[#allocation3] sm:$0xff] %vm238, 0.0
          %306 = vst.msk [vmem:[#allocation3 + $0x8] sm:$0xff] %vm238, 0.0
        $region44: #{tpu_custom_call.1} parent=31 // pred_fallthru
          _
        %v307 = vld [vmem:[#allocation2] sm:$0xff]
        %v308 = vld [vmem:[#allocation2 + $0x8] sm:$0xff]
        %v309 = vmax.f32 %v307, %v253
        %v310 = vmax.f32 %v308, %v268
        %311 = vst.msk [vmem:[#allocation2] sm:$0xff] %vm238, %v309
        %312 = vst.msk [vmem:[#allocation2 + $0x8] sm:$0xff] %vm238, %v310
        %v313 = vld [vmem:[#allocation3] sm:$0xff]
        %v314 = vld [vmem:[#allocation3 + $0x8] sm:$0xff]
        %v315 = vadd.f32 %v313, %v283
        %v316 = vadd.f32 %v314, %v298
        %317 = vst.msk [vmem:[#allocation3] sm:$0xff] %vm238, %v315
        %318 = vst.msk [vmem:[#allocation3 + $0x8] sm:$0xff] %vm238, %v316
        // Predicated region
        $region45: #{tpu_custom_call.1} parent=31 // pred_check
          %p319 = pneg %p299
        $region46: #{tpu_custom_call.1} parent=31 // pred_check_branch
          %321 = sbr.rel (%p319) target = $region48
        $region47: #{tpu_custom_call.1} parent=31 // pred_region
          %v322 = vld [vmem:[#allocation2] sm:$0xff]
          %v323 = vld [vmem:[#allocation2 + $0x8] sm:$0xff]
          %v324 = vld [vmem:[#allocation3] sm:$0xff]
          %v325 = vld [vmem:[#allocation3 + $0x8] sm:$0xff]
          %v326 = vmul.f32 %v324, 0.125
          %v327 = vmul.f32 %v325, 0.125
          %328 = vst [vmem:[#allocation4] sm:$0x7] 0.0
          %329 = vst [vmem:[#allocation4 + $0x13] sm:$0x7] 0.0
          %vm330 = vcmask 1047680
          %331 = vst.msk [vmem:[#allocation4 + $0x3] sm:$0xff] %vm330, 0.0
          %332 = vst.msk [vmem:[#allocation4 + $0xb] sm:$0xff] %vm330, 0.0
          %333 = vst.msk [vmem:[#allocation4 + $0x3] sm:$0xff] %vm238, %v322
          %334 = vst.msk [vmem:[#allocation4 + $0xb] sm:$0xff] %vm238, %v323
          %335 = vst [vmem:[#allocation5] sm:$0x7] 0.0
          %336 = vst [vmem:[#allocation5 + $0x13] sm:$0x7] 0.0
          %337 = vst.msk [vmem:[#allocation5 + $0x3] sm:$0xff] %vm330, 0.0
          %338 = vst.msk [vmem:[#allocation5 + $0xb] sm:$0xff] %vm330, 0.0
          %339 = vst.msk [vmem:[#allocation5 + $0x3] sm:$0xff] %vm238, %v326
          %340 = vst.msk [vmem:[#allocation5 + $0xb] sm:$0xff] %vm238, %v327
          %v341 = vld [vmem:[#allocation4] sm:$0xff]
          %v342 = vld [vmem:[#allocation4 + $0x8] sm:$0xff]
          %343 = vrot.lane.b32.xlu0 %v341, 3
          %v344 = vpop.permute.xlu0 %343
          %345 = vrot.lane.b32.xlu0 %v342, 3
          %v346 = vpop.permute.xlu0 %345
          %s347 = sld [smem:[#allocation11]]
          %v348 = vstv %s347
          %v349 = vmul.f32 %v348, %v344
          %v350 = vmul.f32 %v348, %v346
          %v351 = vadd.f32 %v349, 0.0
          %v352 = vadd.f32 %v350, 0.0
          %353 = vrot.lane.b32.xlu0 %v341, 2
          %v354 = vpop.permute.xlu0 %353
          %355 = vrot.lane.b32.xlu0 %v342, 2
          %v356 = vpop.permute.xlu0 %355
          %s357 = sld [smem:[#allocation11 + $0x1]]
          %v358 = vstv %s357
          %v359 = vmul.f32 %v358, %v354
          %v360 = vmul.f32 %v358, %v356
          %v361 = vadd.f32 %v351, %v359
          %v362 = vadd.f32 %v352, %v360
          %363 = vrot.lane.b32.xlu0 %v341, 1
          %v364 = vpop.permute.xlu0 %363
          %365 = vrot.lane.b32.xlu0 %v342, 1
          %v366 = vpop.permute.xlu0 %365
          %s367 = sld [smem:[#allocation11 + $0x2]]
          %v368 = vstv %s367
          %v369 = vmul.f32 %v368, %v364
          %v370 = vmul.f32 %v368, %v366
          %v371 = vadd.f32 %v361, %v369
          %v372 = vadd.f32 %v362, %v370
          %s373 = sld [smem:[#allocation11 + $0x3]]
          %v374 = vstv %s373
          %v375 = vmul.f32 %v374, %v341
          %v376 = vmul.f32 %v374, %v342
          %v377 = vadd.f32 %v371, %v375
          %v378 = vadd.f32 %v372, %v376
          %379 = vrot.lane.b32.xlu0 %v341, 127
          %v380 = vpop.permute.xlu0 %379
          %381 = vrot.lane.b32.xlu0 %v342, 127
          %v382 = vpop.permute.xlu0 %381
          %s383 = sld [smem:[#allocation11 + $0x4]]
          %v384 = vstv %s383
          %v385 = vmul.f32 %v384, %v380
          %v386 = vmul.f32 %v384, %v382
          %v387 = vadd.f32 %v377, %v385
          %v388 = vadd.f32 %v378, %v386
          %389 = vrot.lane.b32.xlu0 %v341, 126
          %v390 = vpop.permute.xlu0 %389
          %391 = vrot.lane.b32.xlu0 %v342, 126
          %v392 = vpop.permute.xlu0 %391
          %s393 = sld [smem:[#allocation11 + $0x5]]
          %v394 = vstv %s393
          %v395 = vmul.f32 %v394, %v390
          %v396 = vmul.f32 %v394, %v392
          %v397 = vadd.f32 %v387, %v395
          %v398 = vadd.f32 %v388, %v396
          %399 = vrot.lane.b32.xlu0 %v341, 125
          %v400 = vpop.permute.xlu0 %399
          %401 = vrot.lane.b32.xlu0 %v342, 125
          %v402 = vpop.permute.xlu0 %401
          %s403 = sld [smem:[#allocation11 + $0x6]]
          %v404 = vstv %s403
          %v405 = vmul.f32 %v404, %v400
          %v406 = vmul.f32 %v404, %v402
          %v407 = vadd.f32 %v397, %v405
          %v408 = vadd.f32 %v398, %v406
          %v409 = vld [vmem:[#allocation4 + $0x1] sm:$0xff]
          %v410 = vld [vmem:[#allocation4 + $0x9] sm:$0xff]
          %411 = vrot.lane.b32.xlu0 %v409, 3
          %v412 = vpop.permute.xlu0 %411
          %413 = vrot.lane.b32.xlu0 %v410, 3
          %v414 = vpop.permute.xlu0 %413
          %s415 = sld [smem:[#allocation11 + $0x7]]
          %v416 = vstv %s415
          %v417 = vmul.f32 %v416, %v412
          %v418 = vmul.f32 %v416, %v414
          %v419 = vadd.f32 %v407, %v417
          %v420 = vadd.f32 %v408, %v418
          %421 = vrot.lane.b32.xlu0 %v409, 2
          %v422 = vpop.permute.xlu0 %421
          %423 = vrot.lane.b32.xlu0 %v410, 2
          %v424 = vpop.permute.xlu0 %423
          %s425 = sld [smem:[#allocation11 + $0x8]]
          %v426 = vstv %s425
          %v427 = vmul.f32 %v426, %v422
          %v428 = vmul.f32 %v426, %v424
          %v429 = vadd.f32 %v419, %v427
          %v430 = vadd.f32 %v420, %v428
          %431 = vrot.lane.b32.xlu0 %v409, 1
          %v432 = vpop.permute.xlu0 %431
          %433 = vrot.lane.b32.xlu0 %v410, 1
          %v434 = vpop.permute.xlu0 %433
          %s435 = sld [smem:[#allocation11 + $0x9]]
          %v436 = vstv %s435
          %v437 = vmul.f32 %v436, %v432
          %v438 = vmul.f32 %v436, %v434
          %v439 = vadd.f32 %v429, %v437
          %v440 = vadd.f32 %v430, %v438
          %s441 = sld [smem:[#allocation11 + $0xa]]
          %v442 = vstv %s441
          %v443 = vmul.f32 %v442, %v409
          %v444 = vmul.f32 %v442, %v410
          %v445 = vadd.f32 %v439, %v443
          %v446 = vadd.f32 %v440, %v444
          %447 = vrot.lane.b32.xlu0 %v409, 127
          %v448 = vpop.permute.xlu0 %447
          %449 = vrot.lane.b32.xlu0 %v410, 127
          %v450 = vpop.permute.xlu0 %449
          %s451 = sld [smem:[#allocation11 + $0xb]]
          %v452 = vstv %s451
          %v453 = vmul.f32 %v452, %v448
          %v454 = vmul.f32 %v452, %v450
          %v455 = vadd.f32 %v445, %v453
          %v456 = vadd.f32 %v446, %v454
          %457 = vrot.lane.b32.xlu0 %v409, 126
          %v458 = vpop.permute.xlu0 %457
          %459 = vrot.lane.b32.xlu0 %v410, 126
          %v460 = vpop.permute.xlu0 %459
          %s461 = sld [smem:[#allocation11 + $0xc]]
          %v462 = vstv %s461
          %v463 = vmul.f32 %v462, %v458
          %v464 = vmul.f32 %v462, %v460
          %v465 = vadd.f32 %v455, %v463
          %v466 = vadd.f32 %v456, %v464
          %467 = vrot.lane.b32.xlu0 %v409, 125
          %v468 = vpop.permute.xlu0 %467
          %469 = vrot.lane.b32.xlu0 %v410, 125
          %v470 = vpop.permute.xlu0 %469
          %s471 = sld [smem:[#allocation11 + $0xd]]
          %v472 = vstv %s471
          %v473 = vmul.f32 %v472, %v468
          %v474 = vmul.f32 %v472, %v470
          %v475 = vadd.f32 %v465, %v473
          %v476 = vadd.f32 %v466, %v474
          %v477 = vld [vmem:[#allocation4 + $0x2] sm:$0xff]
          %v478 = vld [vmem:[#allocation4 + $0xa] sm:$0xff]
          %479 = vrot.lane.b32.xlu0 %v477, 3
          %v480 = vpop.permute.xlu0 %479
          %481 = vrot.lane.b32.xlu0 %v478, 3
          %v482 = vpop.permute.xlu0 %481
          %s483 = sld [smem:[#allocation11 + $0xe]]
          %v484 = vstv %s483
          %v485 = vmul.f32 %v484, %v480
          %v486 = vmul.f32 %v484, %v482
          %v487 = vadd.f32 %v475, %v485
          %v488 = vadd.f32 %v476, %v486
          %489 = vrot.lane.b32.xlu0 %v477, 2
          %v490 = vpop.permute.xlu0 %489
          %491 = vrot.lane.b32.xlu0 %v478, 2
          %v492 = vpop.permute.xlu0 %491
          %s493 = sld [smem:[#allocation11 + $0xf]]
          %v494 = vstv %s493
          %v495 = vmul.f32 %v494, %v490
          %v496 = vmul.f32 %v494, %v492
          %v497 = vadd.f32 %v487, %v495
          %v498 = vadd.f32 %v488, %v496
          %499 = vrot.lane.b32.xlu0 %v477, 1
          %v500 = vpop.permute.xlu0 %499
          %501 = vrot.lane.b32.xlu0 %v478, 1
          %v502 = vpop.permute.xlu0 %501
          %s503 = sld [smem:[#allocation11 + $0x10]]
          %v504 = vstv %s503
          %v505 = vmul.f32 %v504, %v500
          %v506 = vmul.f32 %v504, %v502
          %v507 = vadd.f32 %v497, %v505
          %v508 = vadd.f32 %v498, %v506
          %s509 = sld [smem:[#allocation11 + $0x11]]
          %v510 = vstv %s509
          %v511 = vmul.f32 %v510, %v477
          %v512 = vmul.f32 %v510, %v478
          %v513 = vadd.f32 %v507, %v511
          %v514 = vadd.f32 %v508, %v512
          %515 = vrot.lane.b32.xlu0 %v477, 127
          %v516 = vpop.permute.xlu0 %515
          %517 = vrot.lane.b32.xlu0 %v478, 127
          %v518 = vpop.permute.xlu0 %517
          %s519 = sld [smem:[#allocation11 + $0x12]]
          %v520 = vstv %s519
          %v521 = vmul.f32 %v520, %v516
          %v522 = vmul.f32 %v520, %v518
          %v523 = vadd.f32 %v513, %v521
          %v524 = vadd.f32 %v514, %v522
          %525 = vrot.lane.b32.xlu0 %v477, 126
          %v526 = vpop.permute.xlu0 %525
          %527 = vrot.lane.b32.xlu0 %v478, 126
          %v528 = vpop.permute.xlu0 %527
          %s529 = sld [smem:[#allocation11 + $0x13]]
          %v530 = vstv %s529
          %v531 = vmul.f32 %v530, %v526
          %v532 = vmul.f32 %v530, %v528
          %v533 = vadd.f32 %v523, %v531
          %v534 = vadd.f32 %v524, %v532
          %535 = vrot.lane.b32.xlu0 %v477, 125
          %v536 = vpop.permute.xlu0 %535
          %537 = vrot.lane.b32.xlu0 %v478, 125
          %v538 = vpop.permute.xlu0 %537
          %s539 = sld [smem:[#allocation11 + $0x14]]
          %v540 = vstv %s539
          %v541 = vmul.f32 %v540, %v536
          %v542 = vmul.f32 %v540, %v538
          %v543 = vadd.f32 %v533, %v541
          %v544 = vadd.f32 %v534, %v542
          %v545 = vld [vmem:[#allocation4 + $0x3] sm:$0xff]
          %v546 = vld [vmem:[#allocation4 + $0xb] sm:$0xff]
          %547 = vrot.lane.b32.xlu0 %v545, 3
          %v548 = vpop.permute.xlu0 %547
          %549 = vrot.lane.b32.xlu0 %v546, 3
          %v550 = vpop.permute.xlu0 %549
          %s551 = sld [smem:[#allocation11 + $0x15]]
          %v552 = vstv %s551
          %v553 = vmul.f32 %v552, %v548
          %v554 = vmul.f32 %v552, %v550
          %v555 = vadd.f32 %v543, %v553
          %v556 = vadd.f32 %v544, %v554
          %557 = vrot.lane.b32.xlu0 %v545, 2
          %v558 = vpop.permute.xlu0 %557
          %559 = vrot.lane.b32.xlu0 %v546, 2
          %v560 = vpop.permute.xlu0 %559
          %s561 = sld [smem:[#allocation11 + $0x16]]
          %v562 = vstv %s561
          %v563 = vmul.f32 %v562, %v558
          %v564 = vmul.f32 %v562, %v560
          %v565 = vadd.f32 %v555, %v563
          %v566 = vadd.f32 %v556, %v564
          %567 = vrot.lane.b32.xlu0 %v545, 1
          %v568 = vpop.permute.xlu0 %567
          %569 = vrot.lane.b32.xlu0 %v546, 1
          %v570 = vpop.permute.xlu0 %569
          %s571 = sld [smem:[#allocation11 + $0x17]]
          %v572 = vstv %s571
          %v573 = vmul.f32 %v572, %v568
          %v574 = vmul.f32 %v572, %v570
          %v575 = vadd.f32 %v565, %v573
          %v576 = vadd.f32 %v566, %v574
          %s577 = sld [smem:[#allocation11 + $0x18]]
          %v578 = vstv %s577
          %v579 = vmul.f32 %v578, %v545
          %v580 = vmul.f32 %v578, %v546
          %v581 = vadd.f32 %v575, %v579
          %v582 = vadd.f32 %v576, %v580
          %583 = vrot.lane.b32.xlu0 %v545, 127
          %v584 = vpop.permute.xlu0 %583
          %585 = vrot.lane.b32.xlu0 %v546, 127
          %v586 = vpop.permute.xlu0 %585
          %s587 = sld [smem:[#allocation11 + $0x19]]
          %v588 = vstv %s587
          %v589 = vmul.f32 %v588, %v584
          %v590 = vmul.f32 %v588, %v586
          %v591 = vadd.f32 %v581, %v589
          %v592 = vadd.f32 %v582, %v590
          %593 = vrot.lane.b32.xlu0 %v545, 126
          %v594 = vpop.permute.xlu0 %593
          %595 = vrot.lane.b32.xlu0 %v546, 126
          %v596 = vpop.permute.xlu0 %595
          %s597 = sld [smem:[#allocation11 + $0x1a]]
          %v598 = vstv %s597
          %v599 = vmul.f32 %v598, %v594
          %v600 = vmul.f32 %v598, %v596
          %v601 = vadd.f32 %v591, %v599
          %v602 = vadd.f32 %v592, %v600
          %603 = vrot.lane.b32.xlu0 %v545, 125
          %v604 = vpop.permute.xlu0 %603
          %605 = vrot.lane.b32.xlu0 %v546, 125
          %v606 = vpop.permute.xlu0 %605
          %s607 = sld [smem:[#allocation11 + $0x1b]]
          %v608 = vstv %s607
          %v609 = vmul.f32 %v608, %v604
          %v610 = vmul.f32 %v608, %v606
          %v611 = vadd.f32 %v601, %v609
          %v612 = vadd.f32 %v602, %v610
          %v613 = vld [vmem:[#allocation4 + $0x4] sm:$0xff]
          %v614 = vld [vmem:[#allocation4 + $0xc] sm:$0xff]
          %615 = vrot.lane.b32.xlu0 %v613, 3
          %v616 = vpop.permute.xlu0 %615
          %617 = vrot.lane.b32.xlu0 %v614, 3
          %v618 = vpop.permute.xlu0 %617
          %s619 = sld [smem:[#allocation11 + $0x1c]]
          %v620 = vstv %s619
          %v621 = vmul.f32 %v620, %v616
          %v622 = vmul.f32 %v620, %v618
          %v623 = vadd.f32 %v611, %v621
          %v624 = vadd.f32 %v612, %v622
          %625 = vrot.lane.b32.xlu0 %v613, 2
          %v626 = vpop.permute.xlu0 %625
          %627 = vrot.lane.b32.xlu0 %v614, 2
          %v628 = vpop.permute.xlu0 %627
          %s629 = sld [smem:[#allocation11 + $0x1d]]
          %v630 = vstv %s629
          %v631 = vmul.f32 %v630, %v626
          %v632 = vmul.f32 %v630, %v628
          %v633 = vadd.f32 %v623, %v631
          %v634 = vadd.f32 %v624, %v632
          %635 = vrot.lane.b32.xlu0 %v613, 1
          %v636 = vpop.permute.xlu0 %635
          %637 = vrot.lane.b32.xlu0 %v614, 1
          %v638 = vpop.permute.xlu0 %637
          %s639 = sld [smem:[#allocation11 + $0x1e]]
          %v640 = vstv %s639
          %v641 = vmul.f32 %v640, %v636
          %v642 = vmul.f32 %v640, %v638
          %v643 = vadd.f32 %v633, %v641
          %v644 = vadd.f32 %v634, %v642
          %s645 = sld [smem:[#allocation11 + $0x1f]]
          %v646 = vstv %s645
          %v647 = vmul.f32 %v646, %v613
          %v648 = vmul.f32 %v646, %v614
          %v649 = vadd.f32 %v643, %v647
          %v650 = vadd.f32 %v644, %v648
          %651 = vrot.lane.b32.xlu0 %v613, 127
          %v652 = vpop.permute.xlu0 %651
          %653 = vrot.lane.b32.xlu0 %v614, 127
          %v654 = vpop.permute.xlu0 %653
          %s655 = sld [smem:[#allocation11 + $0x20]]
          %v656 = vstv %s655
          %v657 = vmul.f32 %v656, %v652
          %v658 = vmul.f32 %v656, %v654
          %v659 = vadd.f32 %v649, %v657
          %v660 = vadd.f32 %v650, %v658
          %661 = vrot.lane.b32.xlu0 %v613, 126
          %v662 = vpop.permute.xlu0 %661
          %663 = vrot.lane.b32.xlu0 %v614, 126
          %v664 = vpop.permute.xlu0 %663
          %s665 = sld [smem:[#allocation11 + $0x21]]
          %v666 = vstv %s665
          %v667 = vmul.f32 %v666, %v662
          %v668 = vmul.f32 %v666, %v664
          %v669 = vadd.f32 %v659, %v667
          %v670 = vadd.f32 %v660, %v668
          %671 = vrot.lane.b32.xlu0 %v613, 125
          %v672 = vpop.permute.xlu0 %671
          %673 = vrot.lane.b32.xlu0 %v614, 125
          %v674 = vpop.permute.xlu0 %673
          %s675 = sld [smem:[#allocation11 + $0x22]]
          %v676 = vstv %s675
          %v677 = vmul.f32 %v676, %v672
          %v678 = vmul.f32 %v676, %v674
          %v679 = vadd.f32 %v669, %v677
          %v680 = vadd.f32 %v670, %v678
          %v681 = vld [vmem:[#allocation4 + $0x5] sm:$0xff]
          %v682 = vld [vmem:[#allocation4 + $0xd] sm:$0xff]
          %683 = vrot.lane.b32.xlu0 %v681, 3
          %v684 = vpop.permute.xlu0 %683
          %685 = vrot.lane.b32.xlu0 %v682, 3
          %v686 = vpop.permute.xlu0 %685
          %s687 = sld [smem:[#allocation11 + $0x23]]
          %v688 = vstv %s687
          %v689 = vmul.f32 %v688, %v684
          %v690 = vmul.f32 %v688, %v686
          %v691 = vadd.f32 %v679, %v689
          %v692 = vadd.f32 %v680, %v690
          %693 = vrot.lane.b32.xlu0 %v681, 2
          %v694 = vpop.permute.xlu0 %693
          %695 = vrot.lane.b32.xlu0 %v682, 2
          %v696 = vpop.permute.xlu0 %695
          %s697 = sld [smem:[#allocation11 + $0x24]]
          %v698 = vstv %s697
          %v699 = vmul.f32 %v698, %v694
          %v700 = vmul.f32 %v698, %v696
          %v701 = vadd.f32 %v691, %v699
          %v702 = vadd.f32 %v692, %v700
          %703 = vrot.lane.b32.xlu0 %v681, 1
          %v704 = vpop.permute.xlu0 %703
          %705 = vrot.lane.b32.xlu0 %v682, 1
          %v706 = vpop.permute.xlu0 %705
          %s707 = sld [smem:[#allocation11 + $0x25]]
          %v708 = vstv %s707
          %v709 = vmul.f32 %v708, %v704
          %v710 = vmul.f32 %v708, %v706
          %v711 = vadd.f32 %v701, %v709
          %v712 = vadd.f32 %v702, %v710
          %s713 = sld [smem:[#allocation11 + $0x26]]
          %v714 = vstv %s713
          %v715 = vmul.f32 %v714, %v681
          %v716 = vmul.f32 %v714, %v682
          %v717 = vadd.f32 %v711, %v715
          %v718 = vadd.f32 %v712, %v716
          %719 = vrot.lane.b32.xlu0 %v681, 127
          %v720 = vpop.permute.xlu0 %719
          %721 = vrot.lane.b32.xlu0 %v682, 127
          %v722 = vpop.permute.xlu0 %721
          %s723 = sld [smem:[#allocation11 + $0x27]]
          %v724 = vstv %s723
          %v725 = vmul.f32 %v724, %v720
          %v726 = vmul.f32 %v724, %v722
          %v727 = vadd.f32 %v717, %v725
          %v728 = vadd.f32 %v718, %v726
          %729 = vrot.lane.b32.xlu0 %v681, 126
          %v730 = vpop.permute.xlu0 %729
          %731 = vrot.lane.b32.xlu0 %v682, 126
          %v732 = vpop.permute.xlu0 %731
          %s733 = sld [smem:[#allocation11 + $0x28]]
          %v734 = vstv %s733
          %v735 = vmul.f32 %v734, %v730
          %v736 = vmul.f32 %v734, %v732
          %v737 = vadd.f32 %v727, %v735
          %v738 = vadd.f32 %v728, %v736
          %739 = vrot.lane.b32.xlu0 %v681, 125
          %v740 = vpop.permute.xlu0 %739
          %741 = vrot.lane.b32.xlu0 %v682, 125
          %v742 = vpop.permute.xlu0 %741
          %s743 = sld [smem:[#allocation11 + $0x29]]
          %v744 = vstv %s743
          %v745 = vmul.f32 %v744, %v740
          %v746 = vmul.f32 %v744, %v742
          %v747 = vadd.f32 %v737, %v745
          %v748 = vadd.f32 %v738, %v746
          %v749 = vld [vmem:[#allocation4 + $0x6] sm:$0xff]
          %v750 = vld [vmem:[#allocation4 + $0xe] sm:$0xff]
          %751 = vrot.lane.b32.xlu0 %v749, 3
          %v752 = vpop.permute.xlu0 %751
          %753 = vrot.lane.b32.xlu0 %v750, 3
          %v754 = vpop.permute.xlu0 %753
          %s755 = sld [smem:[#allocation11 + $0x2a]]
          %v756 = vstv %s755
          %v757 = vmul.f32 %v756, %v752
          %v758 = vmul.f32 %v756, %v754
          %v759 = vadd.f32 %v747, %v757
          %v760 = vadd.f32 %v748, %v758
          %761 = vrot.lane.b32.xlu0 %v749, 2
          %v762 = vpop.permute.xlu0 %761
          %763 = vrot.lane.b32.xlu0 %v750, 2
          %v764 = vpop.permute.xlu0 %763
          %s765 = sld [smem:[#allocation11 + $0x2b]]
          %v766 = vstv %s765
          %v767 = vmul.f32 %v766, %v762
          %v768 = vmul.f32 %v766, %v764
          %v769 = vadd.f32 %v759, %v767
          %v770 = vadd.f32 %v760, %v768
          %771 = vrot.lane.b32.xlu0 %v749, 1
          %v772 = vpop.permute.xlu0 %771
          %773 = vrot.lane.b32.xlu0 %v750, 1
          %v774 = vpop.permute.xlu0 %773
          %s775 = sld [smem:[#allocation11 + $0x2c]]
          %v776 = vstv %s775
          %v777 = vmul.f32 %v776, %v772
          %v778 = vmul.f32 %v776, %v774
          %v779 = vadd.f32 %v769, %v777
          %v780 = vadd.f32 %v770, %v778
          %s781 = sld [smem:[#allocation11 + $0x2d]]
          %v782 = vstv %s781
          %v783 = vmul.f32 %v782, %v749
          %v784 = vmul.f32 %v782, %v750
          %v785 = vadd.f32 %v779, %v783
          %v786 = vadd.f32 %v780, %v784
          %787 = vrot.lane.b32.xlu0 %v749, 127
          %v788 = vpop.permute.xlu0 %787
          %789 = vrot.lane.b32.xlu0 %v750, 127
          %v790 = vpop.permute.xlu0 %789
          %s791 = sld [smem:[#allocation11 + $0x2e]]
          %v792 = vstv %s791
          %v793 = vmul.f32 %v792, %v788
          %v794 = vmul.f32 %v792, %v790
          %v795 = vadd.f32 %v785, %v793
          %v796 = vadd.f32 %v786, %v794
          %797 = vrot.lane.b32.xlu0 %v749, 126
          %v798 = vpop.permute.xlu0 %797
          %799 = vrot.lane.b32.xlu0 %v750, 126
          %v800 = vpop.permute.xlu0 %799
          %s801 = sld [smem:[#allocation11 + $0x2f]]
          %v802 = vstv %s801
          %v803 = vmul.f32 %v802, %v798
          %v804 = vmul.f32 %v802, %v800
          %v805 = vadd.f32 %v795, %v803
          %v806 = vadd.f32 %v796, %v804
          %807 = vrot.lane.b32.xlu0 %v749, 125
          %v808 = vpop.permute.xlu0 %807
          %809 = vrot.lane.b32.xlu0 %v750, 125
          %v810 = vpop.permute.xlu0 %809
          %s811 = sld [smem:[#allocation11 + $0x30]]
          %v812 = vstv %s811
          %v813 = vmul.f32 %v812, %v808
          %v814 = vmul.f32 %v812, %v810
          %v815 = vadd.f32 %v805, %v813
          %v816 = vadd.f32 %v806, %v814
          %v817 = vld [vmem:[#allocation5] sm:$0xff]
          %v818 = vld [vmem:[#allocation5 + $0x8] sm:$0xff]
          %819 = vrot.lane.b32.xlu0 %v817, 3
          %v820 = vpop.permute.xlu0 %819
          %821 = vrot.lane.b32.xlu0 %v818, 3
          %v822 = vpop.permute.xlu0 %821
          %s823 = sld [smem:[#allocation11 + $0x31]]
          %v824 = vstv %s823
          %v825 = vmul.f32 %v824, %v820
          %v826 = vmul.f32 %v824, %v822
          %v827 = vadd.f32 %v815, %v825
          %v828 = vadd.f32 %v816, %v826
          %829 = vrot.lane.b32.xlu0 %v817, 2
          %v830 = vpop.permute.xlu0 %829
          %831 = vrot.lane.b32.xlu0 %v818, 2
          %v832 = vpop.permute.xlu0 %831
          %s833 = sld [smem:[#allocation11 + $0x32]]
          %v834 = vstv %s833
          %v835 = vmul.f32 %v834, %v830
          %v836 = vmul.f32 %v834, %v832
          %v837 = vadd.f32 %v827, %v835
          %v838 = vadd.f32 %v828, %v836
          %839 = vrot.lane.b32.xlu0 %v817, 1
          %v840 = vpop.permute.xlu0 %839
          %841 = vrot.lane.b32.xlu0 %v818, 1
          %v842 = vpop.permute.xlu0 %841
          %s843 = sld [smem:[#allocation11 + $0x33]]
          %v844 = vstv %s843
          %v845 = vmul.f32 %v844, %v840
          %v846 = vmul.f32 %v844, %v842
          %v847 = vadd.f32 %v837, %v845
          %v848 = vadd.f32 %v838, %v846
          %s849 = sld [smem:[#allocation11 + $0x34]]
          %v850 = vstv %s849
          %v851 = vmul.f32 %v850, %v817
          %v852 = vmul.f32 %v850, %v818
          %v853 = vadd.f32 %v847, %v851
          %v854 = vadd.f32 %v848, %v852
          %855 = vrot.lane.b32.xlu0 %v817, 127
          %v856 = vpop.permute.xlu0 %855
          %857 = vrot.lane.b32.xlu0 %v818, 127
          %v858 = vpop.permute.xlu0 %857
          %s859 = sld [smem:[#allocation11 + $0x35]]
          %v860 = vstv %s859
          %v861 = vmul.f32 %v860, %v856
          %v862 = vmul.f32 %v860, %v858
          %v863 = vadd.f32 %v853, %v861
          %v864 = vadd.f32 %v854, %v862
          %865 = vrot.lane.b32.xlu0 %v817, 126
          %v866 = vpop.permute.xlu0 %865
          %867 = vrot.lane.b32.xlu0 %v818, 126
          %v868 = vpop.permute.xlu0 %867
          %s869 = sld [smem:[#allocation11 + $0x36]]
          %v870 = vstv %s869
          %v871 = vmul.f32 %v870, %v866
          %v872 = vmul.f32 %v870, %v868
          %v873 = vadd.f32 %v863, %v871
          %v874 = vadd.f32 %v864, %v872
          %875 = vrot.lane.b32.xlu0 %v817, 125
          %v876 = vpop.permute.xlu0 %875
          %877 = vrot.lane.b32.xlu0 %v818, 125
          %v878 = vpop.permute.xlu0 %877
          %s879 = sld [smem:[#allocation11 + $0x37]]
          %v880 = vstv %s879
          %v881 = vmul.f32 %v880, %v876
          %v882 = vmul.f32 %v880, %v878
          %v883 = vadd.f32 %v873, %v881
          %v884 = vadd.f32 %v874, %v882
          %v885 = vld [vmem:[#allocation5 + $0x1] sm:$0xff]
          %v886 = vld [vmem:[#allocation5 + $0x9] sm:$0xff]
          %887 = vrot.lane.b32.xlu0 %v885, 3
          %v888 = vpop.permute.xlu0 %887
          %889 = vrot.lane.b32.xlu0 %v886, 3
          %v890 = vpop.permute.xlu0 %889
          %s891 = sld [smem:[#allocation11 + $0x38]]
          %v892 = vstv %s891
          %v893 = vmul.f32 %v892, %v888
          %v894 = vmul.f32 %v892, %v890
          %v895 = vadd.f32 %v883, %v893
          %v896 = vadd.f32 %v884, %v894
          %897 = vrot.lane.b32.xlu0 %v885, 2
          %v898 = vpop.permute.xlu0 %897
          %899 = vrot.lane.b32.xlu0 %v886, 2
          %v900 = vpop.permute.xlu0 %899
          %s901 = sld [smem:[#allocation11 + $0x39]]
          %v902 = vstv %s901
          %v903 = vmul.f32 %v902, %v898
          %v904 = vmul.f32 %v902, %v900
          %v905 = vadd.f32 %v895, %v903
          %v906 = vadd.f32 %v896, %v904
          %907 = vrot.lane.b32.xlu0 %v885, 1
          %v908 = vpop.permute.xlu0 %907
          %909 = vrot.lane.b32.xlu0 %v886, 1
          %v910 = vpop.permute.xlu0 %909
          %s911 = sld [smem:[#allocation11 + $0x3a]]
          %v912 = vstv %s911
          %v913 = vmul.f32 %v912, %v908
          %v914 = vmul.f32 %v912, %v910
          %v915 = vadd.f32 %v905, %v913
          %v916 = vadd.f32 %v906, %v914
          %s917 = sld [smem:[#allocation11 + $0x3b]]
          %v918 = vstv %s917
          %v919 = vmul.f32 %v918, %v885
          %v920 = vmul.f32 %v918, %v886
          %v921 = vadd.f32 %v915, %v919
          %v922 = vadd.f32 %v916, %v920
          %923 = vrot.lane.b32.xlu0 %v885, 127
          %v924 = vpop.permute.xlu0 %923
          %925 = vrot.lane.b32.xlu0 %v886, 127
          %v926 = vpop.permute.xlu0 %925
          %s927 = sld [smem:[#allocation11 + $0x3c]]
          %v928 = vstv %s927
          %v929 = vmul.f32 %v928, %v924
          %v930 = vmul.f32 %v928, %v926
          %v931 = vadd.f32 %v921, %v929
          %v932 = vadd.f32 %v922, %v930
          %933 = vrot.lane.b32.xlu0 %v885, 126
          %v934 = vpop.permute.xlu0 %933
          %935 = vrot.lane.b32.xlu0 %v886, 126
          %v936 = vpop.permute.xlu0 %935
          %s937 = sld [smem:[#allocation11 + $0x3d]]
          %v938 = vstv %s937
          %v939 = vmul.f32 %v938, %v934
          %v940 = vmul.f32 %v938, %v936
          %v941 = vadd.f32 %v931, %v939
          %v942 = vadd.f32 %v932, %v940
          %943 = vrot.lane.b32.xlu0 %v885, 125
          %v944 = vpop.permute.xlu0 %943
          %945 = vrot.lane.b32.xlu0 %v886, 125
          %v946 = vpop.permute.xlu0 %945
          %s947 = sld [smem:[#allocation11 + $0x3e]]
          %v948 = vstv %s947
          %v949 = vmul.f32 %v948, %v944
          %v950 = vmul.f32 %v948, %v946
          %v951 = vadd.f32 %v941, %v949
          %v952 = vadd.f32 %v942, %v950
          %v953 = vld [vmem:[#allocation5 + $0x2] sm:$0xff]
          %v954 = vld [vmem:[#allocation5 + $0xa] sm:$0xff]
          %955 = vrot.lane.b32.xlu0 %v953, 3
          %v956 = vpop.permute.xlu0 %955
          %957 = vrot.lane.b32.xlu0 %v954, 3
          %v958 = vpop.permute.xlu0 %957
          %s959 = sld [smem:[#allocation11 + $0x3f]]
          %v960 = vstv %s959
          %v961 = vmul.f32 %v960, %v956
          %v962 = vmul.f32 %v960, %v958
          %v963 = vadd.f32 %v951, %v961
          %v964 = vadd.f32 %v952, %v962
          %965 = vrot.lane.b32.xlu0 %v953, 2
          %v966 = vpop.permute.xlu0 %965
          %967 = vrot.lane.b32.xlu0 %v954, 2
          %v968 = vpop.permute.xlu0 %967
          %s969 = sld [smem:[#allocation11 + $0x40]]
          %v970 = vstv %s969
          %v971 = vmul.f32 %v970, %v966
          %v972 = vmul.f32 %v970, %v968
          %v973 = vadd.f32 %v963, %v971
          %v974 = vadd.f32 %v964, %v972
          %975 = vrot.lane.b32.xlu0 %v953, 1
          %v976 = vpop.permute.xlu0 %975
          %977 = vrot.lane.b32.xlu0 %v954, 1
          %v978 = vpop.permute.xlu0 %977
          %s979 = sld [smem:[#allocation11 + $0x41]]
          %v980 = vstv %s979
          %v981 = vmul.f32 %v980, %v976
          %v982 = vmul.f32 %v980, %v978
          %v983 = vadd.f32 %v973, %v981
          %v984 = vadd.f32 %v974, %v982
          %s985 = sld [smem:[#allocation11 + $0x42]]
          %v986 = vstv %s985
          %v987 = vmul.f32 %v986, %v953
          %v988 = vmul.f32 %v986, %v954
          %v989 = vadd.f32 %v983, %v987
          %v990 = vadd.f32 %v984, %v988
          %991 = vrot.lane.b32.xlu0 %v953, 127
          %v992 = vpop.permute.xlu0 %991
          %993 = vrot.lane.b32.xlu0 %v954, 127
          %v994 = vpop.permute.xlu0 %993
          %s995 = sld [smem:[#allocation11 + $0x43]]
          %v996 = vstv %s995
          %v997 = vmul.f32 %v996, %v992
          %v998 = vmul.f32 %v996, %v994
          %v999 = vadd.f32 %v989, %v997
          %v1000 = vadd.f32 %v990, %v998
          %1001 = vrot.lane.b32.xlu0 %v953, 126
          %v1002 = vpop.permute.xlu0 %1001
          %1003 = vrot.lane.b32.xlu0 %v954, 126
          %v1004 = vpop.permute.xlu0 %1003
          %s1005 = sld [smem:[#allocation11 + $0x44]]
          %v1006 = vstv %s1005
          %v1007 = vmul.f32 %v1006, %v1002
          %v1008 = vmul.f32 %v1006, %v1004
          %v1009 = vadd.f32 %v999, %v1007
          %v1010 = vadd.f32 %v1000, %v1008
          %1011 = vrot.lane.b32.xlu0 %v953, 125
          %v1012 = vpop.permute.xlu0 %1011
          %1013 = vrot.lane.b32.xlu0 %v954, 125
          %v1014 = vpop.permute.xlu0 %1013
          %s1015 = sld [smem:[#allocation11 + $0x45]]
          %v1016 = vstv %s1015
          %v1017 = vmul.f32 %v1016, %v1012
          %v1018 = vmul.f32 %v1016, %v1014
          %v1019 = vadd.f32 %v1009, %v1017
          %v1020 = vadd.f32 %v1010, %v1018
          %v1021 = vld [vmem:[#allocation5 + $0x3] sm:$0xff]
          %v1022 = vld [vmem:[#allocation5 + $0xb] sm:$0xff]
          %1023 = vrot.lane.b32.xlu0 %v1021, 3
          %v1024 = vpop.permute.xlu0 %1023
          %1025 = vrot.lane.b32.xlu0 %v1022, 3
          %v1026 = vpop.permute.xlu0 %1025
          %s1027 = sld [smem:[#allocation11 + $0x46]]
          %v1028 = vstv %s1027
          %v1029 = vmul.f32 %v1028, %v1024
          %v1030 = vmul.f32 %v1028, %v1026
          %v1031 = vadd.f32 %v1019, %v1029
          %v1032 = vadd.f32 %v1020, %v1030
          %1033 = vrot.lane.b32.xlu0 %v1021, 2
          %v1034 = vpop.permute.xlu0 %1033
          %1035 = vrot.lane.b32.xlu0 %v1022, 2
          %v1036 = vpop.permute.xlu0 %1035
          %s1037 = sld [smem:[#allocation11 + $0x47]]
          %v1038 = vstv %s1037
          %v1039 = vmul.f32 %v1038, %v1034
          %v1040 = vmul.f32 %v1038, %v1036
          %v1041 = vadd.f32 %v1031, %v1039
          %v1042 = vadd.f32 %v1032, %v1040
          %1043 = vrot.lane.b32.xlu0 %v1021, 1
          %v1044 = vpop.permute.xlu0 %1043
          %1045 = vrot.lane.b32.xlu0 %v1022, 1
          %v1046 = vpop.permute.xlu0 %1045
          %s1047 = sld [smem:[#allocation11 + $0x48]]
          %v1048 = vstv %s1047
          %v1049 = vmul.f32 %v1048, %v1044
          %v1050 = vmul.f32 %v1048, %v1046
          %v1051 = vadd.f32 %v1041, %v1049
          %v1052 = vadd.f32 %v1042, %v1050
          %s1053 = sld [smem:[#allocation11 + $0x49]]
          %v1054 = vstv %s1053
          %v1055 = vmul.f32 %v1054, %v1021
          %v1056 = vmul.f32 %v1054, %v1022
          %v1057 = vadd.f32 %v1051, %v1055
          %v1058 = vadd.f32 %v1052, %v1056
          %1059 = vrot.lane.b32.xlu0 %v1021, 127
          %v1060 = vpop.permute.xlu0 %1059
          %1061 = vrot.lane.b32.xlu0 %v1022, 127
          %v1062 = vpop.permute.xlu0 %1061
          %s1063 = sld [smem:[#allocation11 + $0x4a]]
          %v1064 = vstv %s1063
          %v1065 = vmul.f32 %v1064, %v1060
          %v1066 = vmul.f32 %v1064, %v1062
          %v1067 = vadd.f32 %v1057, %v1065
          %v1068 = vadd.f32 %v1058, %v1066
          %1069 = vrot.lane.b32.xlu0 %v1021, 126
          %v1070 = vpop.permute.xlu0 %1069
          %1071 = vrot.lane.b32.xlu0 %v1022, 126
          %v1072 = vpop.permute.xlu0 %1071
          %s1073 = sld [smem:[#allocation11 + $0x4b]]
          %v1074 = vstv %s1073
          %v1075 = vmul.f32 %v1074, %v1070
          %v1076 = vmul.f32 %v1074, %v1072
          %v1077 = vadd.f32 %v1067, %v1075
          %v1078 = vadd.f32 %v1068, %v1076
          %1079 = vrot.lane.b32.xlu0 %v1021, 125
          %v1080 = vpop.permute.xlu0 %1079
          %1081 = vrot.lane.b32.xlu0 %v1022, 125
          %v1082 = vpop.permute.xlu0 %1081
          %s1083 = sld [smem:[#allocation11 + $0x4c]]
          %v1084 = vstv %s1083
          %v1085 = vmul.f32 %v1084, %v1080
          %v1086 = vmul.f32 %v1084, %v1082
          %v1087 = vadd.f32 %v1077, %v1085
          %v1088 = vadd.f32 %v1078, %v1086
          %v1089 = vld [vmem:[#allocation5 + $0x4] sm:$0xff]
          %v1090 = vld [vmem:[#allocation5 + $0xc] sm:$0xff]
          %1091 = vrot.lane.b32.xlu0 %v1089, 3
          %v1092 = vpop.permute.xlu0 %1091
          %1093 = vrot.lane.b32.xlu0 %v1090, 3
          %v1094 = vpop.permute.xlu0 %1093
          %s1095 = sld [smem:[#allocation11 + $0x4d]]
          %v1096 = vstv %s1095
          %v1097 = vmul.f32 %v1096, %v1092
          %v1098 = vmul.f32 %v1096, %v1094
          %v1099 = vadd.f32 %v1087, %v1097
          %v1100 = vadd.f32 %v1088, %v1098
          %1101 = vrot.lane.b32.xlu0 %v1089, 2
          %v1102 = vpop.permute.xlu0 %1101
          %1103 = vrot.lane.b32.xlu0 %v1090, 2
          %v1104 = vpop.permute.xlu0 %1103
          %s1105 = sld [smem:[#allocation11 + $0x4e]]
          %v1106 = vstv %s1105
          %v1107 = vmul.f32 %v1106, %v1102
          %v1108 = vmul.f32 %v1106, %v1104
          %v1109 = vadd.f32 %v1099, %v1107
          %v1110 = vadd.f32 %v1100, %v1108
          %1111 = vrot.lane.b32.xlu0 %v1089, 1
          %v1112 = vpop.permute.xlu0 %1111
          %1113 = vrot.lane.b32.xlu0 %v1090, 1
          %v1114 = vpop.permute.xlu0 %1113
          %s1115 = sld [smem:[#allocation11 + $0x4f]]
          %v1116 = vstv %s1115
          %v1117 = vmul.f32 %v1116, %v1112
          %v1118 = vmul.f32 %v1116, %v1114
          %v1119 = vadd.f32 %v1109, %v1117
          %v1120 = vadd.f32 %v1110, %v1118
          %s1121 = sld [smem:[#allocation11 + $0x50]]
          %v1122 = vstv %s1121
          %v1123 = vmul.f32 %v1122, %v1089
          %v1124 = vmul.f32 %v1122, %v1090
          %v1125 = vadd.f32 %v1119, %v1123
          %v1126 = vadd.f32 %v1120, %v1124
          %1127 = vrot.lane.b32.xlu0 %v1089, 127
          %v1128 = vpop.permute.xlu0 %1127
          %1129 = vrot.lane.b32.xlu0 %v1090, 127
          %v1130 = vpop.permute.xlu0 %1129
          %s1131 = sld [smem:[#allocation11 + $0x51]]
          %v1132 = vstv %s1131
          %v1133 = vmul.f32 %v1132, %v1128
          %v1134 = vmul.f32 %v1132, %v1130
          %v1135 = vadd.f32 %v1125, %v1133
          %v1136 = vadd.f32 %v1126, %v1134
          %1137 = vrot.lane.b32.xlu0 %v1089, 126
          %v1138 = vpop.permute.xlu0 %1137
          %1139 = vrot.lane.b32.xlu0 %v1090, 126
          %v1140 = vpop.permute.xlu0 %1139
          %s1141 = sld [smem:[#allocation11 + $0x52]]
          %v1142 = vstv %s1141
          %v1143 = vmul.f32 %v1142, %v1138
          %v1144 = vmul.f32 %v1142, %v1140
          %v1145 = vadd.f32 %v1135, %v1143
          %v1146 = vadd.f32 %v1136, %v1144
          %1147 = vrot.lane.b32.xlu0 %v1089, 125
          %v1148 = vpop.permute.xlu0 %1147
          %1149 = vrot.lane.b32.xlu0 %v1090, 125
          %v1150 = vpop.permute.xlu0 %1149
          %s1151 = sld [smem:[#allocation11 + $0x53]]
          %v1152 = vstv %s1151
          %v1153 = vmul.f32 %v1152, %v1148
          %v1154 = vmul.f32 %v1152, %v1150
          %v1155 = vadd.f32 %v1145, %v1153
          %v1156 = vadd.f32 %v1146, %v1154
          %v1157 = vld [vmem:[#allocation5 + $0x5] sm:$0xff]
          %v1158 = vld [vmem:[#allocation5 + $0xd] sm:$0xff]
          %1159 = vrot.lane.b32.xlu0 %v1157, 3
          %v1160 = vpop.permute.xlu0 %1159
          %1161 = vrot.lane.b32.xlu0 %v1158, 3
          %v1162 = vpop.permute.xlu0 %1161
          %s1163 = sld [smem:[#allocation11 + $0x54]]
          %v1164 = vstv %s1163
          %v1165 = vmul.f32 %v1164, %v1160
          %v1166 = vmul.f32 %v1164, %v1162
          %v1167 = vadd.f32 %v1155, %v1165
          %v1168 = vadd.f32 %v1156, %v1166
          %1169 = vrot.lane.b32.xlu0 %v1157, 2
          %v1170 = vpop.permute.xlu0 %1169
          %1171 = vrot.lane.b32.xlu0 %v1158, 2
          %v1172 = vpop.permute.xlu0 %1171
          %s1173 = sld [smem:[#allocation11 + $0x55]]
          %v1174 = vstv %s1173
          %v1175 = vmul.f32 %v1174, %v1170
          %v1176 = vmul.f32 %v1174, %v1172
          %v1177 = vadd.f32 %v1167, %v1175
          %v1178 = vadd.f32 %v1168, %v1176
          %1179 = vrot.lane.b32.xlu0 %v1157, 1
          %v1180 = vpop.permute.xlu0 %1179
          %1181 = vrot.lane.b32.xlu0 %v1158, 1
          %v1182 = vpop.permute.xlu0 %1181
          %s1183 = sld [smem:[#allocation11 + $0x56]]
          %v1184 = vstv %s1183
          %v1185 = vmul.f32 %v1184, %v1180
          %v1186 = vmul.f32 %v1184, %v1182
          %v1187 = vadd.f32 %v1177, %v1185
          %v1188 = vadd.f32 %v1178, %v1186
          %s1189 = sld [smem:[#allocation11 + $0x57]]
          %v1190 = vstv %s1189
          %v1191 = vmul.f32 %v1190, %v1157
          %v1192 = vmul.f32 %v1190, %v1158
          %v1193 = vadd.f32 %v1187, %v1191
          %v1194 = vadd.f32 %v1188, %v1192
          %1195 = vrot.lane.b32.xlu0 %v1157, 127
          %v1196 = vpop.permute.xlu0 %1195
          %1197 = vrot.lane.b32.xlu0 %v1158, 127
          %v1198 = vpop.permute.xlu0 %1197
          %s1199 = sld [smem:[#allocation11 + $0x58]]
          %v1200 = vstv %s1199
          %v1201 = vmul.f32 %v1200, %v1196
          %v1202 = vmul.f32 %v1200, %v1198
          %v1203 = vadd.f32 %v1193, %v1201
          %v1204 = vadd.f32 %v1194, %v1202
          %1205 = vrot.lane.b32.xlu0 %v1157, 126
          %v1206 = vpop.permute.xlu0 %1205
          %1207 = vrot.lane.b32.xlu0 %v1158, 126
          %v1208 = vpop.permute.xlu0 %1207
          %s1209 = sld [smem:[#allocation11 + $0x59]]
          %v1210 = vstv %s1209
          %v1211 = vmul.f32 %v1210, %v1206
          %v1212 = vmul.f32 %v1210, %v1208
          %v1213 = vadd.f32 %v1203, %v1211
          %v1214 = vadd.f32 %v1204, %v1212
          %1215 = vrot.lane.b32.xlu0 %v1157, 125
          %v1216 = vpop.permute.xlu0 %1215
          %1217 = vrot.lane.b32.xlu0 %v1158, 125
          %v1218 = vpop.permute.xlu0 %1217
          %s1219 = sld [smem:[#allocation11 + $0x5a]]
          %v1220 = vstv %s1219
          %v1221 = vmul.f32 %v1220, %v1216
          %v1222 = vmul.f32 %v1220, %v1218
          %v1223 = vadd.f32 %v1213, %v1221
          %v1224 = vadd.f32 %v1214, %v1222
          %v1225 = vld [vmem:[#allocation5 + $0x6] sm:$0xff]
          %v1226 = vld [vmem:[#allocation5 + $0xe] sm:$0xff]
          %1227 = vrot.lane.b32.xlu0 %v1225, 3
          %v1228 = vpop.permute.xlu0 %1227
          %1229 = vrot.lane.b32.xlu0 %v1226, 3
          %v1230 = vpop.permute.xlu0 %1229
          %s1231 = sld [smem:[#allocation11 + $0x5b]]
          %v1232 = vstv %s1231
          %v1233 = vmul.f32 %v1232, %v1228
          %v1234 = vmul.f32 %v1232, %v1230
          %v1235 = vadd.f32 %v1223, %v1233
          %v1236 = vadd.f32 %v1224, %v1234
          %1237 = vrot.lane.b32.xlu0 %v1225, 2
          %v1238 = vpop.permute.xlu0 %1237
          %1239 = vrot.lane.b32.xlu0 %v1226, 2
          %v1240 = vpop.permute.xlu0 %1239
          %s1241 = sld [smem:[#allocation11 + $0x5c]]
          %v1242 = vstv %s1241
          %v1243 = vmul.f32 %v1242, %v1238
          %v1244 = vmul.f32 %v1242, %v1240
          %v1245 = vadd.f32 %v1235, %v1243
          %v1246 = vadd.f32 %v1236, %v1244
          %1247 = vrot.lane.b32.xlu0 %v1225, 1
          %v1248 = vpop.permute.xlu0 %1247
          %1249 = vrot.lane.b32.xlu0 %v1226, 1
          %v1250 = vpop.permute.xlu0 %1249
          %s1251 = sld [smem:[#allocation11 + $0x5d]]
          %v1252 = vstv %s1251
          %v1253 = vmul.f32 %v1252, %v1248
          %v1254 = vmul.f32 %v1252, %v1250
          %v1255 = vadd.f32 %v1245, %v1253
          %v1256 = vadd.f32 %v1246, %v1254
          %s1257 = sld [smem:[#allocation11 + $0x5e]]
          %v1258 = vstv %s1257
          %v1259 = vmul.f32 %v1258, %v1225
          %v1260 = vmul.f32 %v1258, %v1226
          %v1261 = vadd.f32 %v1255, %v1259
          %v1262 = vadd.f32 %v1256, %v1260
          %1263 = vrot.lane.b32.xlu0 %v1225, 127
          %v1264 = vpop.permute.xlu0 %1263
          %1265 = vrot.lane.b32.xlu0 %v1226, 127
          %v1266 = vpop.permute.xlu0 %1265
          %s1267 = sld [smem:[#allocation11 + $0x5f]]
          %v1268 = vstv %s1267
          %v1269 = vmul.f32 %v1268, %v1264
          %v1270 = vmul.f32 %v1268, %v1266
          %v1271 = vadd.f32 %v1261, %v1269
          %v1272 = vadd.f32 %v1262, %v1270
          %1273 = vrot.lane.b32.xlu0 %v1225, 126
          %v1274 = vpop.permute.xlu0 %1273
          %1275 = vrot.lane.b32.xlu0 %v1226, 126
          %v1276 = vpop.permute.xlu0 %1275
          %s1277 = sld [smem:[#allocation11 + $0x60]]
          %v1278 = vstv %s1277
          %v1279 = vmul.f32 %v1278, %v1274
          %v1280 = vmul.f32 %v1278, %v1276
          %v1281 = vadd.f32 %v1271, %v1279
          %v1282 = vadd.f32 %v1272, %v1280
          %1283 = vrot.lane.b32.xlu0 %v1225, 125
          %v1284 = vpop.permute.xlu0 %1283
          %1285 = vrot.lane.b32.xlu0 %v1226, 125
          %v1286 = vpop.permute.xlu0 %1285
          %s1287 = sld [smem:[#allocation11 + $0x61]]
          %v1288 = vstv %s1287
          %v1289 = vmul.f32 %v1288, %v1284
          %v1290 = vmul.f32 %v1288, %v1286
          %v1291 = vadd.f32 %v1281, %v1289
          %v1292 = vadd.f32 %v1282, %v1290
          %s1293 = sld [smem:[#allocation6]]
          %v1294 = vstv %s1293
          %v1295 = vadd.f32 %v1291, %v1294
          %v1296 = vadd.f32 %v1292, %v1294
          %v1297 = vmax.f32 %v1295, 0.0
          %v1298 = vmax.f32 %v1296, 0.0
          %v1299 = vsub.f32 0.0, %v1297
          %v1300 = vsub.f32 0.0, %v1298
          %v1301 = vmul.f32 %v1299, 1.442695
          %v1302 = vpow.pop %v1301
          %v1303 = vmul.f32 %v1300, 1.442695
          %v1304 = vpow.pop %v1303
          %v1305 = vadd.f32 %v1302, 1.0
          %v1306 = vadd.f32 %v1304, 1.0
          %v1307 = vrcp.pop %v1305
          %v1308 = vmul.f32 1.0, %v1307
          %v1309 = vrcp.pop %v1306
          %v1310 = vmul.f32 1.0, %v1309
          %1311 = vst [vmem:[%s220] sm:$0xff] %v1308
          %1312 = vst [vmem:[%s220 + $0x8] sm:$0xff] %v1310
        $region48: #{tpu_custom_call.1} parent=31 // pred_fallthru
          _
        %s1313 = sand.u32 %s112, 1
        %s1314 = scalar_lea.sflag [#allocation9], %s1313
        %s1315 = sand.u32 %s112, 1
        %s1316 = smul.addr %s1315, 16
        %s1317 = scalar_lea.vmem [#allocation12], %s1316
        // Predicated region
        $region49: #{tpu_custom_call.1} parent=31 // pred_check
          %p1318 = pneg %p122
        $region50: #{tpu_custom_call.1} parent=31 // pred_check_branch
          %1320 = sbr.rel (%p1318) target = $region52
        $region51: #{tpu_custom_call.1} parent=31 // pred_region
          %s1322 = ssub.s32 256, 256
          %1323 = vsyncadd %s1314, %s1322
          %s1324 = smul.addr %s26, 2
          %s1325 = smul.addr %s1324, 128
          %s1326 = scalar_lea.hbm %s3, %s1325
          %s1327 = sshll.u32 %s1317, 4
          %s1328 = int_to_ptr.vmem [resolvable:$true] %s1327
          %1333 = dma.vmem_to_hbm [thread:$0]  %s1328, 256, %s1326, %s1314, 128, 128, 8
        $region52: #{tpu_custom_call.1} parent=31 // pred_fallthru
          _
      $region32: #{tpu_custom_call.1} parent=5 // pred_fallthru
        _
      %p1334 = scmp.le.s32.totalorder 2, %s17
      // Predicated region
      $region53: #{tpu_custom_call.1} parent=5 // pred_check
        %p1335 = pneg %p1334
      $region54: #{tpu_custom_call.1} parent=5 // pred_check_branch
        %1337 = sbr.rel (%p1335) target = $region56
      $region55: #{tpu_custom_call.1} parent=5 // pred_region
        %s1338 = ssub.s32 %s17, 2
        // Predicated region
        $region57: #{tpu_custom_call.1} parent=55 // pred_check
          %p1339 = pneg %p128
        $region58: #{tpu_custom_call.1} parent=55 // pred_check_branch
          %1341 = sbr.rel (%p1339) target = $region60
        $region59: #{tpu_custom_call.1} parent=55 // pred_region
          %s1342 = sand.u32 %s113, 1
          %s1343 = scalar_lea.sflag [#allocation9], %s1342
          %s1344 = sand.u32 %s113, 1
          %s1345 = smul.addr %s1344, 16
          %s1346 = scalar_lea.vmem [#allocation12], %s1345
          %1347 = dma.done %s1343, 256
        $region60: #{tpu_custom_call.1} parent=55 // pred_fallthru
          _
      $region56: #{tpu_custom_call.1} parent=5 // pred_fallthru
        _
    $region6: #{tpu_custom_call.1} parent=1 // loop_footer
      %s21 = sadd.s32 1, %s17
    $region7: #{tpu_custom_call.1} parent=1 // loop_footer_branch
      %16 = sbr.rel target = $region3
    $region8: #{tpu_custom_call.1} parent=1 // loop_exit
      _
    %1348 = vsyncpa [#allocation8], 1
    %s1349 = scalar_lea.sflag [#allocation8], 1
    %1350 = vsyncpa %s1349, 1
    %1351 = vsyncpa [#allocation9], 1
    %s1352 = scalar_lea.sflag [#allocation9], 1
    %1353 = vsyncpa %s1352, 1
    %1354 = vsyncpa [#allocation10], 1
    %s1355 = scalar_lea.sflag [#allocation10], 1
    %1356 = vsyncpa %s1355, 1

</llo_original>
